<compile_context>
chip_gen: v5e
topology: v5e:2x2
jax: 0.10.0
libtpu: 0.0.40
codegen_flags: <defaults>
</compile_context>

<pallas_src>
import functools

import jax
import jax.numpy as jnp
from jax.experimental import pallas as pl
from jax.experimental.pallas import tpu as pltpu

EPS = 1e-5
LANE = 128


def _ceil_to(x, m):
    return ((x + m - 1) // m) * m


# ---------------------------------------------------------------------------
# Kernels
# ---------------------------------------------------------------------------

def _conv_bn_kernel(x_ref, x_hbm, w_ref, b_ref, sc_ref, sh_ref,
                    y_ref, st_ref, halo_buf, sem, *, bn_relu_input):
    """One (image, H-tile) step of a reflect-'same' 3x3 conv (+optional folded
    BN+ReLU of the input), emitting the pre-BN conv output tile (bf16) plus
    per-tile BN partial statistics (f32).

      x_ref   : (1, TH, W, Ci)  auto-pipelined bf16 input tile
      x_hbm   : (N, H, W, Ci)   raw HBM ref (only the 2 halo rows are DMA'd)
      w_ref   : (9, Ci, Co)     bf16 per-tap weights (dy-major, dx-minor)
      b_ref   : (1, Co)         conv bias (f32)
      sc/sh   : (1, Ci)         folded BN scale/shift for the input (pass 2)
      y_ref   : (1, TH, W, Co)  pre-BN conv output (bf16)
      st_ref  : (1, 1, 2, Co)   per-tile [sum, sum_of_squares] of y (f32)
    """
    n = pl.program_id(0)
    h = pl.program_id(1)
    gh = pl.num_programs(1)

    _, th, w, ci = x_ref.shape
    co = y_ref.shape[-1]
    h_total = x_hbm.shape[1]

    # Scalar halo addressing + DMA starts first (before any vector work/waits).
    # Reflect (exclude edge) at the image borders, exactly padding_mode='reflect'.
    top_src = jnp.where(h == 0, 1, h * th - 1)
    bot_src = jnp.where(h == gh - 1, h_total - 2, (h + 1) * th)
    top_cp = pltpu.make_async_copy(x_hbm.at[n, top_src], halo_buf.at[0], sem.at[0])
    bot_cp = pltpu.make_async_copy(x_hbm.at[n, bot_src], halo_buf.at[1], sem.at[1])
    top_cp.start()
    bot_cp.start()

    def bn_pad_w(v):
        # Optional folded BN + ReLU (f32 math), bf16 result, reflect-pad along W.
        if bn_relu_input:
            v = jnp.maximum(v.astype(jnp.float32) * sc_ref[...] + sh_ref[...], 0.0)
        v = v.astype(jnp.bfloat16)
        return jnp.concatenate([v[:, 1:2], v, v[:, w - 2:w - 1]], axis=1)

    def tap(rows, dy):
        # rows: (TH, W+2, Ci) bf16 holding input rows (out_row + dy - 1).
        part = None
        for dx in range(3):
            lhs = rows[:, dx:dx + w, :].reshape(th * w, ci)
            d = jnp.dot(lhs, w_ref[3 * dy + dx],
                        preferred_element_type=jnp.float32)
            part = d if part is None else part + d
        return part

    mid = bn_pad_w(x_ref[0])                      # (TH, W+2, Ci) bf16
    acc = tap(mid, 1)                             # halo-free third hides the DMA

    top_cp.wait()
    bot_cp.wait()
    hal = bn_pad_w(halo_buf[...])                 # (2, W+2, Ci) bf16
    strip = jnp.concatenate([hal[0:1], mid, hal[1:2]], axis=0)  # (TH+2, W+2, Ci)
    acc = acc + tap(strip[0:th], 0)
    acc = acc + tap(strip[2:th + 2], 2)

    y = acc + b_ref[...]                          # (TH*W, Co) f32 with conv bias
    y_ref[0] = y.reshape(th, w, co).astype(y_ref.dtype)

    # Per-tile partial BN statistics (finalized across all tiles outside).
    # TODO(synk): E[y^2]-E[y]^2 can cancel for large activations; a Welford /
    # centered combine in _finalize_bn would be more robust.
    st_ref[0, 0] = jnp.concatenate(
        [jnp.sum(y, axis=0, keepdims=True),
         jnp.sum(y * y, axis=0, keepdims=True)], axis=0)


def _bn_relu_kernel(y_ref, sc_ref, sh_ref, o_ref):
    y = y_ref[0].astype(jnp.float32)
    o_ref[0] = jnp.maximum(y * sc_ref[...] + sh_ref[...], 0.0).astype(o_ref.dtype)


# ---------------------------------------------------------------------------
# Wrappers
# ---------------------------------------------------------------------------

def _vmem_budgets():
    """(vmem_limit_bytes, per-tile working-set budget) -- generation aware."""
    cap = 0
    try:
        cap = int(getattr(pltpu.get_tpu_info(), "vmem_capacity_bytes", 0) or 0)
    except Exception:
        cap = 0
    if cap >= (100 << 20):             # v5e / v6e: 128 MiB physical VMEM
        return 96 << 20, 56 << 20
    return 44 << 20, 20 << 20          # v7x (64 MiB / TC) or unknown: conservative


def _compiler_params(vmem_limit):
    return pltpu.CompilerParams(
        dimension_semantics=("parallel", "parallel"),   # megacore on v7x
        vmem_limit_bytes=int(vmem_limit))


def _pick_conv_tile_h(h, w, cin_p, cout_p, budget):
    # TODO(synk): support a remainder tile instead of only exact divisors of H.
    best = 1
    for th in range(1, h + 1):
        if h % th:
            continue
        io = 2 * th * w * (cin_p + cout_p) * 2            # double-buffered bf16 IO
        tmp16 = 4 * (th + 2) * (w + 2) * cin_p * 2        # strip / per-tap slices
        tmp32 = th * w * (cin_p + 2 * cout_p) * 4         # BN temp + f32 acc/result
        wgt = 9 * cin_p * cout_p * 2
        if io + tmp16 + tmp32 + wgt <= budget:
            best = th
    return best


def _pick_ew_tile_h(h, w, c_p, budget):
    best = 1
    for th in range(1, h + 1):
        if h % th:
            continue
        if th * w * c_p * (2 * (2 + 4) + 2 * 4) <= budget:
            best = th
    return best


def _conv_pass(x, w9, b, sc, sh, tile_h, vmem_limit, *, bn_relu_input):
    n, h, wdt, cin_p = x.shape
    cout_p = w9.shape[-1]
    gh = h // tile_h
    kern = functools.partial(_conv_bn_kernel, bn_relu_input=bn_relu_input)

    flops = 2 * n * h * wdt * (9 * cin_p) * cout_p
    bytes_acc = (n * h * wdt * cin_p * 2 + n * h * wdt * cout_p * 2
                 + n * gh * 2 * cout_p * 4 + 9 * cin_p * cout_p * 2)

    y, st = pl.pallas_call(
        kern,
        grid=(n, gh),
        in_specs=[
            pl.BlockSpec((1, tile_h, wdt, cin_p), lambda i, j: (i, j, 0, 0)),
            pl.BlockSpec(memory_space=pl.ANY),            # raw HBM, halo rows only
            pl.BlockSpec((9, cin_p, cout_p), lambda i, j: (0, 0, 0)),
            pl.BlockSpec((1, cout_p), lambda i, j: (0, 0)),
            pl.BlockSpec((1, cin_p), lambda i, j: (0, 0)),
            pl.BlockSpec((1, cin_p), lambda i, j: (0, 0)),
        ],
        out_specs=[
            pl.BlockSpec((1, tile_h, wdt, cout_p), lambda i, j: (i, j, 0, 0)),
            pl.BlockSpec((1, 1, 2, cout_p), lambda i, j: (i, j, 0, 0)),
        ],
        out_shape=[
            jax.ShapeDtypeStruct((n, h, wdt, cout_p), jnp.bfloat16),
            jax.ShapeDtypeStruct((n, gh, 2, cout_p), jnp.float32),
        ],
        scratch_shapes=[
            pltpu.VMEM((2, wdt, cin_p), x.dtype),          # halo landing buffer
            pltpu.SemaphoreType.DMA((2,)),
        ],
        compiler_params=_compiler_params(vmem_limit),
        cost_estimate=pl.CostEstimate(flops=int(flops), transcendentals=0,
                                      bytes_accessed=int(bytes_acc)),
    )(x, x, w9, b, sc, sh)
    return y, st


def _bn_relu_pass(y, sc, sh, tile_h, vmem_limit):
    n, h, wdt, c_p = y.shape
    gh = h // tile_h
    flops = 3 * n * h * wdt * c_p
    bytes_acc = n * h * wdt * c_p * (2 + 4) + 2 * c_p * 4
    return pl.pallas_call(
        _bn_relu_kernel,
        grid=(n, gh),
        in_specs=[
            pl.BlockSpec((1, tile_h, wdt, c_p), lambda i, j: (i, j, 0, 0)),
            pl.BlockSpec((1, c_p), lambda i, j: (0, 0)),
            pl.BlockSpec((1, c_p), lambda i, j: (0, 0)),
        ],
        out_specs=pl.BlockSpec((1, tile_h, wdt, c_p), lambda i, j: (i, j, 0, 0)),
        out_shape=jax.ShapeDtypeStruct((n, h, wdt, c_p), jnp.float32),
        compiler_params=_compiler_params(vmem_limit),
        cost_estimate=pl.CostEstimate(flops=int(flops), transcendentals=0,
                                      bytes_accessed=int(bytes_acc)),
    )(y, sc, sh)


def _prep_weight(w_hwio, cin_p, cout_p):
    """(3,3,Cin,Cout) HWIO -> (9, Cin_p, Cout_p) bf16, dy-major / dx-minor."""
    kh, kw, cin, cout = w_hwio.shape
    wp = jnp.zeros((kh, kw, cin_p, cout_p), jnp.float32)
    wp = wp.at[:, :, :cin, :cout].set(w_hwio.astype(jnp.float32))
    return wp.reshape(kh * kw, cin_p, cout_p).astype(jnp.bfloat16)


def _pad_row(v, c_p):
    return jnp.zeros((1, c_p), jnp.float32).at[0, :v.shape[0]].set(
        v.astype(jnp.float32))


def _finalize_bn(stats, count, gamma, beta, c_p):
    """Fold global batch mean/var + gamma/beta into one scale+shift per channel."""
    s = jnp.sum(stats.astype(jnp.float32), axis=(0, 1))    # (2, Cp)
    mean = s[0] / count
    var = jnp.maximum(s[1] / count - mean * mean, 0.0)
    g = _pad_row(gamma, c_p)[0]
    b = _pad_row(beta, c_p)[0]
    scale = g * jax.lax.rsqrt(var + EPS)
    shift = b - mean * scale
    return scale.reshape(1, c_p), shift.reshape(1, c_p)


def double_conv(x_nchw, params, tile_h=None):
    """Pallas DoubleConv forward. x_nchw: (N, Cin, H, W) -> (N, Cout, H, W)."""
    w1, b1, g1, bt1, w2, b2, g2, bt2 = params
    n, cin, h, w = x_nchw.shape
    cout = w1.shape[-1]
    assert h >= 2 and w >= 2, "reflect padding requires H, W >= 2"

    cin_p = _ceil_to(cin, LANE)
    cout_p = _ceil_to(cout, LANE)
    vmem_limit, budget = _vmem_budgets()

    if tile_h is None:
        th1 = _pick_conv_tile_h(h, w, cin_p, cout_p, budget)
        th2 = _pick_conv_tile_h(h, w, cout_p, cout_p, budget)
    else:
        th1 = max(1, min(int(tile_h), h))
        while h % th1:
            th1 -= 1
        th2 = th1
    th3 = _pick_ew_tile_h(h, w, cout_p, budget)

    # NCHW -> NHWC, channel-pad to a multiple of 128, bf16 storage (lane-dense,
    # half the HBM traffic of f32).
    x = jnp.transpose(x_nchw, (0, 2, 3, 1)).astype(jnp.float32)
    x = jnp.pad(x, ((0, 0), (0, 0), (0, 0), (0, cin_p - cin))).astype(jnp.bfloat16)

    w1p = _prep_weight(w1, cin_p, cout_p)
    w2p = _prep_weight(w2, cout_p, cout_p)
    b1p = _pad_row(b1, cout_p)
    b2p = _pad_row(b2, cout_p)
    dummy_sc = jnp.ones((1, cin_p), jnp.float32)     # unused (pass-1 flag is off)
    dummy_sh = jnp.zeros((1, cin_p), jnp.float32)
    count = n * h * w

    # Pass 1: conv1(+bias) -> y1 (pre-BN, bf16) + BN1 partial stats.
    y1, st1 = _conv_pass(x, w1p, b1p, dummy_sc, dummy_sh, th1, vmem_limit,
                         bn_relu_input=False)
    sc1, sh1 = _finalize_bn(st1, count, g1, bt1, cout_p)

    # Pass 2: BN1+ReLU on the fly, conv2(+bias) -> y2 (pre-BN, bf16) + BN2 stats.
    y2, st2 = _conv_pass(y1, w2p, b2p, sc1, sh1, th2, vmem_limit,
                         bn_relu_input=True)
    sc2, sh2 = _finalize_bn(st2, count, g2, bt2, cout_p)

    # Pass 3: BN2 + ReLU (pure streaming pass with its own, larger tile).
    out = _bn_relu_pass(y2, sc2, sh2, th3, vmem_limit)

    if cout_p != cout:
        out = out[..., :cout]
    return jnp.transpose(out, (0, 3, 1, 2))                 # NHWC -> NCHW


# ---------------------------------------------------------------------------
# References & test
# ---------------------------------------------------------------------------

def _reference_f32(x_nchw, params):
    """Pure-f32 PyTorch-semantics reference (sanity bound only)."""
    w1, b1, g1, bt1, w2, b2, g2, bt2 = params
    x = jnp.transpose(x_nchw, (0, 2, 3, 1)).astype(jnp.float32)

    def block(a, w, b, g, bt):
        ap = jnp.pad(a, ((0, 0), (1, 1), (1, 1), (0, 0)), mode="reflect")
        y = jax.lax.conv_general_dilated(
            ap, w, (1, 1), "VALID", dimension_numbers=("NHWC", "HWIO", "NHWC"),
            precision=jax.lax.Precision.HIGHEST) + b
        m = jnp.mean(y, axis=(0, 1, 2), keepdims=True)
        v = jnp.mean((y - m) ** 2, axis=(0, 1, 2), keepdims=True)
        return jnp.maximum((y - m) * jax.lax.rsqrt(v + EPS) * g + bt, 0.0)

    y = block(x, w1, b1, g1, bt1)
    y = block(y, w2, b2, g2, bt2)
    return jnp.transpose(y, (0, 3, 1, 2))


def _reference_matched(x_nchw, params):
    """Reference that mirrors the kernel's precision choices exactly: bf16 conv
    operands (f32 accumulation), bf16 inter-pass storage of y1/y2, and the same
    folded scale/shift BN (E[y^2]-E[y]^2 in f32)."""
    w1, b1, g1, bt1, w2, b2, g2, bt2 = params
    f32, bf16 = jnp.float32, jnp.bfloat16
    x = jnp.transpose(x_nchw, (0, 2, 3, 1)).astype(bf16)
    n, h, wdt, _ = x.shape
    count = n * h * wdt

    def conv(a_bf16, w, b):
        ap = jnp.pad(a_bf16, ((0, 0), (1, 1), (1, 1), (0, 0)), mode="reflect")
        y = jax.lax.conv_general_dilated(
            ap.astype(f32), w.astype(bf16).astype(f32), (1, 1), "VALID",
            dimension_numbers=("NHWC", "HWIO", "NHWC"),
            precision=jax.lax.Precision.HIGHEST)
        return y + b.astype(f32)

    def fold(y, g, bt):
        mean = jnp.sum(y, axis=(0, 1, 2)) / count
        var = jnp.maximum(jnp.sum(y * y, axis=(0, 1, 2)) / count - mean * mean, 0.0)
        scale = g * jax.lax.rsqrt(var + EPS)
        return scale, bt - mean * scale

    y1 = conv(x, w1, b1)
    sc1, sh1 = fold(y1, g1, bt1)
    a1 = jnp.maximum(y1.astype(bf16).astype(f32) * sc1 + sh1, 0.0).astype(bf16)
    y2 = conv(a1, w2, b2)
    sc2, sh2 = fold(y2, g2, bt2)
    out = jnp.maximum(y2.astype(bf16).astype(f32) * sc2 + sh2, 0.0)
    return jnp.transpose(out, (0, 3, 1, 2))


def init_params(key, inc, outc):
    """Deterministic parameter init (shapes match DoubleConv.__init__)."""
    k1, k2, k3, k4 = jax.random.split(key, 4)
    w1 = jax.random.normal(k1, (3, 3, inc, outc), jnp.float32) * 0.2   # HWIO
    b1 = jax.random.normal(k2, (outc,), jnp.float32) * 0.05
    g1 = jnp.ones((outc,), jnp.float32)       # BN weight
    bt1 = jnp.zeros((outc,), jnp.float32)     # BN bias
    w2 = jax.random.normal(k3, (3, 3, outc, outc), jnp.float32) * 0.2
    b2 = jax.random.normal(k4, (outc,), jnp.float32) * 0.05
    g2 = jnp.ones((outc,), jnp.float32)
    bt2 = jnp.zeros((outc,), jnp.float32)
    return (w1, b1, g1, bt1, w2, b2, g2, bt2)


if __name__ == "__main__":
    key = jax.random.PRNGKey(0)
    kx, kp = jax.random.split(key)

    N, Cin, Cout, H, W = 2, 4, 8, 16, 16
    x = jax.random.normal(kx, (N, Cin, H, W), jnp.float32)
    params = init_params(kp, Cin, Cout)

    # tile_h=8 => 2 H-tiles per image, exercising the in-kernel halo DMA path.
    y = jax.block_until_ready(double_conv(x, params, tile_h=8))
    ref_m = jax.block_until_ready(_reference_matched(x, params))
    ref_f = jax.block_until_ready(_reference_f32(x, params))

    assert y.shape == (N, Cout, H, W), y.shape
    d_m = jnp.abs(y - ref_m)
    d_f = jnp.abs(y - ref_f)
    err_m, mean_m = float(jnp.max(d_m)), float(jnp.mean(d_m))
    err_f, mean_f = float(jnp.max(d_f)), float(jnp.mean(d_f))
    # Precision-matched reference: only accumulation-order noise + rare one-ulp
    # bf16 flips should remain.  Pure-f32 reference: loose sanity bound for the
    # deliberate bf16-MXU / bf16-intermediate choice.
    assert err_m < 5e-2 and mean_m < 5e-3, (err_m, mean_m)
    assert err_f < 3e-1 and mean_f < 5e-2, (err_f, mean_f)
    print("KERNEL_OK")
</pallas_src>

<mosaic_0001>
module attributes {stable_mosaic.version = 11 : i64} {
  func.func @_conv_bn_kernel(%arg0: i32, %arg1: i32, %arg2: memref<1x8x16x128xbf16, #tpu.memory_space<vmem>>, %arg3: memref<2x16x16x128xbf16, #tpu.memory_space<any>>, %arg4: memref<9x128x128xbf16, #tpu.memory_space<vmem>>, %arg5: memref<1x128xf32, #tpu.memory_space<vmem>>, %arg6: memref<1x128xf32, #tpu.memory_space<vmem>>, %arg7: memref<1x128xf32, #tpu.memory_space<vmem>>, %arg8: memref<1x8x16x128xbf16, #tpu.memory_space<vmem>>, %arg9: memref<1x1x2x128xf32, #tpu.memory_space<vmem>>, %arg10: memref<2x16x128xbf16, #tpu.memory_space<vmem>>, %arg11: memref<2x!tpu.dma_semaphore, #tpu.memory_space<semaphore_mem>>) attributes {dimension_semantics = [#tpu.dimension_semantics<parallel>, #tpu.dimension_semantics<parallel>], iteration_bounds = array<i64: 2, 2>, scalar_prefetch = 0 : i64, scratch_operands = 2 : i64, tpu.core_type = #tpu.core_type<tc>, window_params = [{transform_indices = @transform_0, window_bounds = array<i64: 1, 8, 16, 128>}, {}, {pipeline_mode = #tpu.pipeline_mode<synchronous>, transform_indices = @transform_2, window_bounds = array<i64: 9, 128, 128>}, {pipeline_mode = #tpu.pipeline_mode<synchronous>, transform_indices = @transform_3, window_bounds = array<i64: 1, 128>}, {pipeline_mode = #tpu.pipeline_mode<synchronous>, transform_indices = @transform_4, window_bounds = array<i64: 1, 128>}, {pipeline_mode = #tpu.pipeline_mode<synchronous>, transform_indices = @transform_5, window_bounds = array<i64: 1, 128>}, {transform_indices = @transform_6, window_bounds = array<i64: 1, 8, 16, 128>}, {transform_indices = @transform_7, window_bounds = array<i64: 1, 1, 2, 128>}]} {
    %c0_i32 = arith.constant 0 : i32
    %0 = arith.cmpi eq, %arg1, %c0_i32 : i32
    %c8_i32 = arith.constant 8 : i32
    %1 = arith.muli %arg1, %c8_i32 : i32
    %c1_i32 = arith.constant 1 : i32
    %2 = arith.subi %1, %c1_i32 : i32
    %c1_i32_0 = arith.constant 1 : i32
    %3 = arith.select %0, %c1_i32_0, %2 : i32
    %c1_i32_1 = arith.constant 1 : i32
    %4 = arith.cmpi eq, %arg1, %c1_i32_1 : i32
    %c1_i32_2 = arith.constant 1 : i32
    %5 = arith.addi %arg1, %c1_i32_2 : i32
    %c8_i32_3 = arith.constant 8 : i32
    %6 = arith.muli %5, %c8_i32_3 : i32
    %c14_i32 = arith.constant 14 : i32
    %7 = arith.select %4, %c14_i32, %6 : i32
    %c0_i32_4 = arith.constant 0 : i32
    %c0_i32_5 = arith.constant 0 : i32
    %c0_i32_6 = arith.constant 0 : i32
    %c0_i32_7 = arith.constant 0 : i32
    %8 = tpu.memref_slice %arg3[%arg0, %3, %c0_i32_6, %c0_i32_7] : memref<2x16x16x128xbf16, #tpu.memory_space<any>> -> memref<1x1x16x128xbf16, #tpu.memory_space<any>>
    %9 = tpu.memref_squeeze %8 : memref<1x1x16x128xbf16, #tpu.memory_space<any>> -> memref<16x128xbf16, #tpu.memory_space<any>>
    %c0_i32_8 = arith.constant 0 : i32
    %c0_i32_9 = arith.constant 0 : i32
    %10 = tpu.memref_slice %arg10[%c0_i32_4, %c0_i32_8, %c0_i32_9] : memref<2x16x128xbf16, #tpu.memory_space<vmem>> -> memref<1x16x128xbf16, #tpu.memory_space<vmem>>
    %11 = tpu.memref_squeeze %10 : memref<1x16x128xbf16, #tpu.memory_space<vmem>> -> memref<16x128xbf16, #tpu.memory_space<vmem>>
    %12 = tpu.memref_slice %arg11[%c0_i32_5] : memref<2x!tpu.dma_semaphore, #tpu.memory_space<semaphore_mem>> -> memref<1x!tpu.dma_semaphore, #tpu.memory_space<semaphore_mem>>
    %13 = tpu.memref_squeeze %12 : memref<1x!tpu.dma_semaphore, #tpu.memory_space<semaphore_mem>> -> memref<!tpu.dma_semaphore, #tpu.memory_space<semaphore_mem>>
    tpu.enqueue_dma source(%9 : memref<16x128xbf16, #tpu.memory_space<any>>) target(%11 : memref<16x128xbf16, #tpu.memory_space<vmem>>) target_semaphore(%13 : memref<!tpu.dma_semaphore, #tpu.memory_space<semaphore_mem>>)
    %c1_i32_10 = arith.constant 1 : i32
    %c1_i32_11 = arith.constant 1 : i32
    %c0_i32_12 = arith.constant 0 : i32
    %c0_i32_13 = arith.constant 0 : i32
    %14 = tpu.memref_slice %arg3[%arg0, %7, %c0_i32_12, %c0_i32_13] : memref<2x16x16x128xbf16, #tpu.memory_space<any>> -> memref<1x1x16x128xbf16, #tpu.memory_space<any>>
    %15 = tpu.memref_squeeze %14 : memref<1x1x16x128xbf16, #tpu.memory_space<any>> -> memref<16x128xbf16, #tpu.memory_space<any>>
    %c0_i32_14 = arith.constant 0 : i32
    %c0_i32_15 = arith.constant 0 : i32
    %16 = tpu.memref_slice %arg10[%c1_i32_10, %c0_i32_14, %c0_i32_15] : memref<2x16x128xbf16, #tpu.memory_space<vmem>> -> memref<1x16x128xbf16, #tpu.memory_space<vmem>>
    %17 = tpu.memref_squeeze %16 : memref<1x16x128xbf16, #tpu.memory_space<vmem>> -> memref<16x128xbf16, #tpu.memory_space<vmem>>
    %18 = tpu.memref_slice %arg11[%c1_i32_11] : memref<2x!tpu.dma_semaphore, #tpu.memory_space<semaphore_mem>> -> memref<1x!tpu.dma_semaphore, #tpu.memory_space<semaphore_mem>>
    %19 = tpu.memref_squeeze %18 : memref<1x!tpu.dma_semaphore, #tpu.memory_space<semaphore_mem>> -> memref<!tpu.dma_semaphore, #tpu.memory_space<semaphore_mem>>
    tpu.enqueue_dma source(%15 : memref<16x128xbf16, #tpu.memory_space<any>>) target(%17 : memref<16x128xbf16, #tpu.memory_space<vmem>>) target_semaphore(%19 : memref<!tpu.dma_semaphore, #tpu.memory_space<semaphore_mem>>)
    %c0 = arith.constant 0 : index
    %c0_16 = arith.constant 0 : index
    %c0_17 = arith.constant 0 : index
    %c0_18 = arith.constant 0 : index
    %20 = vector.load %arg2[%c0, %c0_16, %c0_17, %c0_18] : memref<1x8x16x128xbf16, #tpu.memory_space<vmem>>, vector<1x8x16x128xbf16>
    %21 = vector.shape_cast %20 : vector<1x8x16x128xbf16> to vector<8x16x128xbf16>
    %22 = vector.extract_strided_slice %21 {offsets = [0, 1, 0], sizes = [8, 1, 128], strides = [1, 1, 1]} : vector<8x16x128xbf16> to vector<8x1x128xbf16>
    %23 = vector.extract_strided_slice %21 {offsets = [0, 14, 0], sizes = [8, 1, 128], strides = [1, 1, 1]} : vector<8x16x128xbf16> to vector<8x1x128xbf16>
    %24 = tpu.concatenate %22, %21, %23 in 1 : vector<8x1x128xbf16>, vector<8x16x128xbf16>, vector<8x1x128xbf16> -> vector<8x18x128xbf16>
    %25 = vector.extract_strided_slice %24 {offsets = [0, 0, 0], sizes = [8, 16, 128], strides = [1, 1, 1]} : vector<8x18x128xbf16> to vector<8x16x128xbf16>
    %26 = vector.shape_cast %25 : vector<8x16x128xbf16> to vector<128x128xbf16>
    %c3 = arith.constant 3 : index
    %c0_19 = arith.constant 0 : index
    %c0_20 = arith.constant 0 : index
    %27 = vector.load %arg4[%c3, %c0_19, %c0_20] : memref<9x128x128xbf16, #tpu.memory_space<vmem>>, vector<1x128x128xbf16>
    %28 = vector.shape_cast %27 : vector<1x128x128xbf16> to vector<128x128xbf16>
    %cst = arith.constant dense<0.000000e+00> : vector<128x128xf32>
    %29 = tpu.matmul %26, %28, %cst {dimension_numbers = #tpu.dot_dimension_numbers<[1], [0], [0], [1], [0, 0, 1, 1], [], []>} : vector<128x128xbf16>, vector<128x128xbf16>, vector<128x128xf32> -> vector<128x128xf32>
    %30 = vector.extract_strided_slice %24 {offsets = [0, 1, 0], sizes = [8, 16, 128], strides = [1, 1, 1]} : vector<8x18x128xbf16> to vector<8x16x128xbf16>
    %31 = vector.shape_cast %30 : vector<8x16x128xbf16> to vector<128x128xbf16>
    %c4 = arith.constant 4 : index
    %c0_21 = arith.constant 0 : index
    %c0_22 = arith.constant 0 : index
    %32 = vector.load %arg4[%c4, %c0_21, %c0_22] : memref<9x128x128xbf16, #tpu.memory_space<vmem>>, vector<1x128x128xbf16>
    %33 = vector.shape_cast %32 : vector<1x128x128xbf16> to vector<128x128xbf16>
    %cst_23 = arith.constant dense<0.000000e+00> : vector<128x128xf32>
    %34 = tpu.matmul %31, %33, %cst_23 {dimension_numbers = #tpu.dot_dimension_numbers<[1], [0], [0], [1], [0, 0, 1, 1], [], []>} : vector<128x128xbf16>, vector<128x128xbf16>, vector<128x128xf32> -> vector<128x128xf32>
    %35 = arith.addf %29, %34 : vector<128x128xf32>
    %36 = vector.extract_strided_slice %24 {offsets = [0, 2, 0], sizes = [8, 16, 128], strides = [1, 1, 1]} : vector<8x18x128xbf16> to vector<8x16x128xbf16>
    %37 = vector.shape_cast %36 : vector<8x16x128xbf16> to vector<128x128xbf16>
    %c5 = arith.constant 5 : index
    %c0_24 = arith.constant 0 : index
    %c0_25 = arith.constant 0 : index
    %38 = vector.load %arg4[%c5, %c0_24, %c0_25] : memref<9x128x128xbf16, #tpu.memory_space<vmem>>, vector<1x128x128xbf16>
    %39 = vector.shape_cast %38 : vector<1x128x128xbf16> to vector<128x128xbf16>
    %cst_26 = arith.constant dense<0.000000e+00> : vector<128x128xf32>
    %40 = tpu.matmul %37, %39, %cst_26 {dimension_numbers = #tpu.dot_dimension_numbers<[1], [0], [0], [1], [0, 0, 1, 1], [], []>} : vector<128x128xbf16>, vector<128x128xbf16>, vector<128x128xf32> -> vector<128x128xf32>
    %41 = arith.addf %35, %40 : vector<128x128xf32>
    %c0_i32_27 = arith.constant 0 : i32
    %c0_i32_28 = arith.constant 0 : i32
    %c0_i32_29 = arith.constant 0 : i32
    %c0_i32_30 = arith.constant 0 : i32
    %42 = tpu.memref_slice %arg3[%arg0, %3, %c0_i32_29, %c0_i32_30] : memref<2x16x16x128xbf16, #tpu.memory_space<any>> -> memref<1x1x16x128xbf16, #tpu.memory_space<any>>
    %43 = tpu.memref_squeeze %42 : memref<1x1x16x128xbf16, #tpu.memory_space<any>> -> memref<16x128xbf16, #tpu.memory_space<any>>
    %c0_i32_31 = arith.constant 0 : i32
    %c0_i32_32 = arith.constant 0 : i32
    %44 = tpu.memref_slice %arg10[%c0_i32_27, %c0_i32_31, %c0_i32_32] : memref<2x16x128xbf16, #tpu.memory_space<vmem>> -> memref<1x16x128xbf16, #tpu.memory_space<vmem>>
    %45 = tpu.memref_squeeze %44 : memref<1x16x128xbf16, #tpu.memory_space<vmem>> -> memref<16x128xbf16, #tpu.memory_space<vmem>>
    %46 = tpu.memref_slice %arg11[%c0_i32_28] : memref<2x!tpu.dma_semaphore, #tpu.memory_space<semaphore_mem>> -> memref<1x!tpu.dma_semaphore, #tpu.memory_space<semaphore_mem>>
    %47 = tpu.memref_squeeze %46 : memref<1x!tpu.dma_semaphore, #tpu.memory_space<semaphore_mem>> -> memref<!tpu.dma_semaphore, #tpu.memory_space<semaphore_mem>>
    tpu.wait_dma2 semaphore(%47 : memref<!tpu.dma_semaphore, #tpu.memory_space<semaphore_mem>>) src(%43 : memref<16x128xbf16, #tpu.memory_space<any>>) dst(%45 : memref<16x128xbf16, #tpu.memory_space<vmem>>)
    %c1_i32_33 = arith.constant 1 : i32
    %c1_i32_34 = arith.constant 1 : i32
    %c0_i32_35 = arith.constant 0 : i32
    %c0_i32_36 = arith.constant 0 : i32
    %48 = tpu.memref_slice %arg3[%arg0, %7, %c0_i32_35, %c0_i32_36] : memref<2x16x16x128xbf16, #tpu.memory_space<any>> -> memref<1x1x16x128xbf16, #tpu.memory_space<any>>
    %49 = tpu.memref_squeeze %48 : memref<1x1x16x128xbf16, #tpu.memory_space<any>> -> memref<16x128xbf16, #tpu.memory_space<any>>
    %c0_i32_37 = arith.constant 0 : i32
    %c0_i32_38 = arith.constant 0 : i32
    %50 = tpu.memref_slice %arg10[%c1_i32_33, %c0_i32_37, %c0_i32_38] : memref<2x16x128xbf16, #tpu.memory_space<vmem>> -> memref<1x16x128xbf16, #tpu.memory_space<vmem>>
    %51 = tpu.memref_squeeze %50 : memref<1x16x128xbf16, #tpu.memory_space<vmem>> -> memref<16x128xbf16, #tpu.memory_space<vmem>>
    %52 = tpu.memref_slice %arg11[%c1_i32_34] : memref<2x!tpu.dma_semaphore, #tpu.memory_space<semaphore_mem>> -> memref<1x!tpu.dma_semaphore, #tpu.memory_space<semaphore_mem>>
    %53 = tpu.memref_squeeze %52 : memref<1x!tpu.dma_semaphore, #tpu.memory_space<semaphore_mem>> -> memref<!tpu.dma_semaphore, #tpu.memory_space<semaphore_mem>>
    tpu.wait_dma2 semaphore(%53 : memref<!tpu.dma_semaphore, #tpu.memory_space<semaphore_mem>>) src(%49 : memref<16x128xbf16, #tpu.memory_space<any>>) dst(%51 : memref<16x128xbf16, #tpu.memory_space<vmem>>)
    %c0_39 = arith.constant 0 : index
    %c0_40 = arith.constant 0 : index
    %c0_41 = arith.constant 0 : index
    %54 = vector.load %arg10[%c0_39, %c0_40, %c0_41] : memref<2x16x128xbf16, #tpu.memory_space<vmem>>, vector<2x16x128xbf16>
    %55 = vector.extract_strided_slice %54 {offsets = [0, 1, 0], sizes = [2, 1, 128], strides = [1, 1, 1]} : vector<2x16x128xbf16> to vector<2x1x128xbf16>
    %56 = vector.extract_strided_slice %54 {offsets = [0, 14, 0], sizes = [2, 1, 128], strides = [1, 1, 1]} : vector<2x16x128xbf16> to vector<2x1x128xbf16>
    %57 = tpu.concatenate %55, %54, %56 in 1 : vector<2x1x128xbf16>, vector<2x16x128xbf16>, vector<2x1x128xbf16> -> vector<2x18x128xbf16>
    %58 = vector.extract_strided_slice %57 {offsets = [0, 0, 0], sizes = [1, 18, 128], strides = [1, 1, 1]} : vector<2x18x128xbf16> to vector<1x18x128xbf16>
    %59 = vector.extract_strided_slice %57 {offsets = [1, 0, 0], sizes = [1, 18, 128], strides = [1, 1, 1]} : vector<2x18x128xbf16> to vector<1x18x128xbf16>
    %60 = tpu.concatenate %58, %24, %59 in 0 : vector<1x18x128xbf16>, vector<8x18x128xbf16>, vector<1x18x128xbf16> -> vector<10x18x128xbf16>
    %61 = vector.extract_strided_slice %60 {offsets = [0, 0, 0], sizes = [8, 18, 128], strides = [1, 1, 1]} : vector<10x18x128xbf16> to vector<8x18x128xbf16>
    %62 = vector.extract_strided_slice %61 {offsets = [0, 0, 0], sizes = [8, 16, 128], strides = [1, 1, 1]} : vector<8x18x128xbf16> to vector<8x16x128xbf16>
    %63 = vector.shape_cast %62 : vector<8x16x128xbf16> to vector<128x128xbf16>
    %c0_42 = arith.constant 0 : index
    %c0_43 = arith.constant 0 : index
    %c0_44 = arith.constant 0 : index
    %64 = vector.load %arg4[%c0_42, %c0_43, %c0_44] : memref<9x128x128xbf16, #tpu.memory_space<vmem>>, vector<1x128x128xbf16>
    %65 = vector.shape_cast %64 : vector<1x128x128xbf16> to vector<128x128xbf16>
    %cst_45 = arith.constant dense<0.000000e+00> : vector<128x128xf32>
    %66 = tpu.matmul %63, %65, %cst_45 {dimension_numbers = #tpu.dot_dimension_numbers<[1], [0], [0], [1], [0, 0, 1, 1], [], []>} : vector<128x128xbf16>, vector<128x128xbf16>, vector<128x128xf32> -> vector<128x128xf32>
    %67 = vector.extract_strided_slice %61 {offsets = [0, 1, 0], sizes = [8, 16, 128], strides = [1, 1, 1]} : vector<8x18x128xbf16> to vector<8x16x128xbf16>
    %68 = vector.shape_cast %67 : vector<8x16x128xbf16> to vector<128x128xbf16>
    %c1 = arith.constant 1 : index
    %c0_46 = arith.constant 0 : index
    %c0_47 = arith.constant 0 : index
    %69 = vector.load %arg4[%c1, %c0_46, %c0_47] : memref<9x128x128xbf16, #tpu.memory_space<vmem>>, vector<1x128x128xbf16>
    %70 = vector.shape_cast %69 : vector<1x128x128xbf16> to vector<128x128xbf16>
    %cst_48 = arith.constant dense<0.000000e+00> : vector<128x128xf32>
    %71 = tpu.matmul %68, %70, %cst_48 {dimension_numbers = #tpu.dot_dimension_numbers<[1], [0], [0], [1], [0, 0, 1, 1], [], []>} : vector<128x128xbf16>, vector<128x128xbf16>, vector<128x128xf32> -> vector<128x128xf32>
    %72 = arith.addf %66, %71 : vector<128x128xf32>
    %73 = vector.extract_strided_slice %61 {offsets = [0, 2, 0], sizes = [8, 16, 128], strides = [1, 1, 1]} : vector<8x18x128xbf16> to vector<8x16x128xbf16>
    %74 = vector.shape_cast %73 : vector<8x16x128xbf16> to vector<128x128xbf16>
    %c2 = arith.constant 2 : index
    %c0_49 = arith.constant 0 : index
    %c0_50 = arith.constant 0 : index
    %75 = vector.load %arg4[%c2, %c0_49, %c0_50] : memref<9x128x128xbf16, #tpu.memory_space<vmem>>, vector<1x128x128xbf16>
    %76 = vector.shape_cast %75 : vector<1x128x128xbf16> to vector<128x128xbf16>
    %cst_51 = arith.constant dense<0.000000e+00> : vector<128x128xf32>
    %77 = tpu.matmul %74, %76, %cst_51 {dimension_numbers = #tpu.dot_dimension_numbers<[1], [0], [0], [1], [0, 0, 1, 1], [], []>} : vector<128x128xbf16>, vector<128x128xbf16>, vector<128x128xf32> -> vector<128x128xf32>
    %78 = arith.addf %72, %77 : vector<128x128xf32>
    %79 = arith.addf %41, %78 : vector<128x128xf32>
    %80 = vector.extract_strided_slice %60 {offsets = [2, 0, 0], sizes = [8, 18, 128], strides = [1, 1, 1]} : vector<10x18x128xbf16> to vector<8x18x128xbf16>
    %81 = vector.extract_strided_slice %80 {offsets = [0, 0, 0], sizes = [8, 16, 128], strides = [1, 1, 1]} : vector<8x18x128xbf16> to vector<8x16x128xbf16>
    %82 = vector.shape_cast %81 : vector<8x16x128xbf16> to vector<128x128xbf16>
    %c6 = arith.constant 6 : index
    %c0_52 = arith.constant 0 : index
    %c0_53 = arith.constant 0 : index
    %83 = vector.load %arg4[%c6, %c0_52, %c0_53] : memref<9x128x128xbf16, #tpu.memory_space<vmem>>, vector<1x128x128xbf16>
    %84 = vector.shape_cast %83 : vector<1x128x128xbf16> to vector<128x128xbf16>
    %cst_54 = arith.constant dense<0.000000e+00> : vector<128x128xf32>
    %85 = tpu.matmul %82, %84, %cst_54 {dimension_numbers = #tpu.dot_dimension_numbers<[1], [0], [0], [1], [0, 0, 1, 1], [], []>} : vector<128x128xbf16>, vector<128x128xbf16>, vector<128x128xf32> -> vector<128x128xf32>
    %86 = vector.extract_strided_slice %80 {offsets = [0, 1, 0], sizes = [8, 16, 128], strides = [1, 1, 1]} : vector<8x18x128xbf16> to vector<8x16x128xbf16>
    %87 = vector.shape_cast %86 : vector<8x16x128xbf16> to vector<128x128xbf16>
    %c7 = arith.constant 7 : index
    %c0_55 = arith.constant 0 : index
    %c0_56 = arith.constant 0 : index
    %88 = vector.load %arg4[%c7, %c0_55, %c0_56] : memref<9x128x128xbf16, #tpu.memory_space<vmem>>, vector<1x128x128xbf16>
    %89 = vector.shape_cast %88 : vector<1x128x128xbf16> to vector<128x128xbf16>
    %cst_57 = arith.constant dense<0.000000e+00> : vector<128x128xf32>
    %90 = tpu.matmul %87, %89, %cst_57 {dimension_numbers = #tpu.dot_dimension_numbers<[1], [0], [0], [1], [0, 0, 1, 1], [], []>} : vector<128x128xbf16>, vector<128x128xbf16>, vector<128x128xf32> -> vector<128x128xf32>
    %91 = arith.addf %85, %90 : vector<128x128xf32>
    %92 = vector.extract_strided_slice %80 {offsets = [0, 2, 0], sizes = [8, 16, 128], strides = [1, 1, 1]} : vector<8x18x128xbf16> to vector<8x16x128xbf16>
    %93 = vector.shape_cast %92 : vector<8x16x128xbf16> to vector<128x128xbf16>
    %c8 = arith.constant 8 : index
    %c0_58 = arith.constant 0 : index
    %c0_59 = arith.constant 0 : index
    %94 = vector.load %arg4[%c8, %c0_58, %c0_59] : memref<9x128x128xbf16, #tpu.memory_space<vmem>>, vector<1x128x128xbf16>
    %95 = vector.shape_cast %94 : vector<1x128x128xbf16> to vector<128x128xbf16>
    %cst_60 = arith.constant dense<0.000000e+00> : vector<128x128xf32>
    %96 = tpu.matmul %93, %95, %cst_60 {dimension_numbers = #tpu.dot_dimension_numbers<[1], [0], [0], [1], [0, 0, 1, 1], [], []>} : vector<128x128xbf16>, vector<128x128xbf16>, vector<128x128xf32> -> vector<128x128xf32>
    %97 = arith.addf %91, %96 : vector<128x128xf32>
    %98 = arith.addf %79, %97 : vector<128x128xf32>
    %c0_61 = arith.constant 0 : index
    %c0_62 = arith.constant 0 : index
    %99 = vector.load %arg5[%c0_61, %c0_62] : memref<1x128xf32, #tpu.memory_space<vmem>>, vector<1x128xf32>
    %100 = vector.broadcast %99 : vector<1x128xf32> to vector<128x128xf32>
    %101 = arith.addf %98, %100 : vector<128x128xf32>
    %102 = vector.shape_cast %101 : vector<128x128xf32> to vector<8x16x128xf32>
    %103 = arith.truncf %102 : vector<8x16x128xf32> to vector<8x16x128xbf16>
    %c0_63 = arith.constant 0 : index
    %c0_64 = arith.constant 0 : index
    %c0_65 = arith.constant 0 : index
    %c0_66 = arith.constant 0 : index
    %104 = vector.load %arg8[%c0_63, %c0_64, %c0_65, %c0_66] : memref<1x8x16x128xbf16, #tpu.memory_space<vmem>>, vector<1x8x16x128xbf16>
    %105 = vector.shape_cast %104 : vector<1x8x16x128xbf16> to vector<8x16x128xbf16>
    %106 = vector.shape_cast %103 : vector<8x16x128xbf16> to vector<1x8x16x128xbf16>
    tpu.vector_store %arg8[%c0_63, %c0_64, %c0_65, %c0_66], %106 {strides = array<i32>} : memref<1x8x16x128xbf16, #tpu.memory_space<vmem>>, vector<1x8x16x128xbf16>,
    %cst_67 = arith.constant dense<0.000000e+00> : vector<128xf32>
    %107 = vector.multi_reduction <add>, %101, %cst_67 [0] : vector<128x128xf32> to vector<128xf32>
    %108 = vector.shape_cast %107 : vector<128xf32> to vector<1x128xf32>
    %109 = arith.mulf %101, %101 : vector<128x128xf32>
    %cst_68 = arith.constant dense<0.000000e+00> : vector<128xf32>
    %110 = vector.multi_reduction <add>, %109, %cst_68 [0] : vector<128x128xf32> to vector<128xf32>
    %111 = vector.shape_cast %110 : vector<128xf32> to vector<1x128xf32>
    %112 = tpu.concatenate %108, %111 in 0 : vector<1x128xf32>, vector<1x128xf32> -> vector<2x128xf32>
    %c0_69 = arith.constant 0 : index
    %c0_70 = arith.constant 0 : index
    %c0_71 = arith.constant 0 : index
    %c0_72 = arith.constant 0 : index
    %113 = vector.load %arg9[%c0_69, %c0_70, %c0_71, %c0_72] : memref<1x1x2x128xf32, #tpu.memory_space<vmem>>, vector<1x1x2x128xf32>
    %114 = vector.shape_cast %113 : vector<1x1x2x128xf32> to vector<2x128xf32>
    %115 = vector.shape_cast %112 : vector<2x128xf32> to vector<1x1x2x128xf32>
    tpu.vector_store %arg9[%c0_69, %c0_70, %c0_71, %c0_72], %115 {strides = array<i32>} : memref<1x1x2x128xf32, #tpu.memory_space<vmem>>, vector<1x1x2x128xf32>,
    return
  }
  func.func @transform_0(%arg0: i32, %arg1: i32) -> (i32, i32, i32, i32) {
    %c0_i32 = arith.constant 0 : i32
    %c0_i32_0 = arith.constant 0 : i32
    %c0_i32_1 = arith.constant 0 : i32
    return %arg0, %arg1, %c0_i32, %c0_i32_0 : i32, i32, i32, i32
  }
  func.func @transform_2(%arg0: i32, %arg1: i32) -> (i32, i32, i32) {
    %c0_i32 = arith.constant 0 : i32
    %c0_i32_0 = arith.constant 0 : i32
    %c0_i32_1 = arith.constant 0 : i32
    %c0_i32_2 = arith.constant 0 : i32
    return %c0_i32, %c0_i32_0, %c0_i32_1 : i32, i32, i32
  }
  func.func @transform_3(%arg0: i32, %arg1: i32) -> (i32, i32) {
    %c0_i32 = arith.constant 0 : i32
    %c0_i32_0 = arith.constant 0 : i32
    %c0_i32_1 = arith.constant 0 : i32
    return %c0_i32, %c0_i32_0 : i32, i32
  }
  func.func @transform_4(%arg0: i32, %arg1: i32) -> (i32, i32) {
    %c0_i32 = arith.constant 0 : i32
    %c0_i32_0 = arith.constant 0 : i32
    %c0_i32_1 = arith.constant 0 : i32
    return %c0_i32, %c0_i32_0 : i32, i32
  }
  func.func @transform_5(%arg0: i32, %arg1: i32) -> (i32, i32) {
    %c0_i32 = arith.constant 0 : i32
    %c0_i32_0 = arith.constant 0 : i32
    %c0_i32_1 = arith.constant 0 : i32
    return %c0_i32, %c0_i32_0 : i32, i32
  }
  func.func @transform_6(%arg0: i32, %arg1: i32) -> (i32, i32, i32, i32) {
    %c0_i32 = arith.constant 0 : i32
    %c0_i32_0 = arith.constant 0 : i32
    %c0_i32_1 = arith.constant 0 : i32
    return %arg0, %arg1, %c0_i32, %c0_i32_0 : i32, i32, i32, i32
  }
  func.func @transform_7(%arg0: i32, %arg1: i32) -> (i32, i32, i32, i32) {
    %c0_i32 = arith.constant 0 : i32
    %c0_i32_0 = arith.constant 0 : i32
    %c0_i32_1 = arith.constant 0 : i32
    return %arg0, %arg1, %c0_i32, %c0_i32_0 : i32, i32, i32, i32
  }
}

</mosaic_0001>

<llo_original>
// kernel: tpu_custom_call.1
$region0: #{tpu_custom_call.1}
  #allocation0 [shape = 'u32[]', space=smem, size = 0x4, offset = 0x4, fixed_abs, tag = 'smem constant byte address 0x4 - core index']
  #allocation1 [shape = 'u32[72,128]{1,0:T(1,128)}', space=vmem, size = 0x9000, scoped, tag = 'internal scratch']
  #allocation2 [shape = 'bf16[2,16,128]{2,1,0:T(8,128)(2,1)}', space=vmem, size = 0x2000, scoped, tag = 'scratch operand']
  #allocation3 [shape = 's32[2]{0}', space=sflag, size = 0x8, scoped, tag = 'scratch operand']
  #allocation12 [shape = 's32[]', space=sflag, size = 0x4, offset = 0, fixed_abs, tag = 'sflag constant byte address 0x0 - dummy sync flag']
  #allocation13 [shape = 's32[]', space=sflag, size = 0x4, offset = 0, fixed_abs, tag = 'sflag constant byte address 0x0 - dummy sync flag']
  #allocation14 [shape = 'u32[]', space=smem, size = 0x4, offset = 0x44, fixed_abs, tag = 'smem constant byte address 0x44 - assertion arg 0']
  #allocation15 [shape = 'u32[]', space=smem, size = 0x4, offset = 0x48, fixed_abs, tag = 'smem constant byte address 0x48 - assertion arg 1']
  #allocation16 [shape = 's32[]', space=sflag, size = 0x4, offset = 0, fixed_abs, tag = 'sflag constant byte address 0x0 - dummy sync flag']
  #allocation17 [shape = 's32[]', space=sflag, size = 0x4, offset = 0, fixed_abs, tag = 'sflag constant byte address 0x0 - dummy sync flag']
  %s0 = inlined_call_operand.hbm [shape: bf16[2,16,16,128], index: 0, kind: input, shape index: {}]
  %s1 = inlined_call_operand.hbm [shape: bf16[2,16,16,128], index: 1, kind: input, shape index: {}]
  %s2 = inlined_call_operand.hbm [shape: bf16[9,128,128], index: 2, kind: input, shape index: {}]
  %s3 = inlined_call_operand.vmem [shape: f32[1,128], index: 3, kind: input, shape index: {}]
  %s4 = inlined_call_operand.vmem [shape: f32[1,128], index: 4, kind: input, shape index: {}]
  %s5 = inlined_call_operand.vmem [shape: f32[1,128], index: 5, kind: input, shape index: {}]
  %s6 = inlined_call_operand.hbm [shape: bf16[2,16,16,128], index: 6, kind: output, shape index: {0}]
  %s7 = inlined_call_operand.hbm [shape: f32[2,2,2,128], index: 7, kind: output, shape index: {1}]
  %8 = xla_tuple %s6, %s7
  %s9 = sld [smem:[#allocation0]]
  $region77: #{tpu_custom_call.1} parent=0
    _
  %s11 = ssub.s32 1, %s9
  %s12 = scalar_select 0, %s11, %s9
  $region1: #{tpu_custom_call.1} parent=0
    #allocation4 [shape = 'u8[65536]{0}', space=vmem, size = 0x10000, scoped, tag = 'input window, operand 0']
    #allocation5 [shape = 's32[2]{0}', space=sflag, size = 0x8, scoped, tag = 'scoped memory for tpu_custom_call.1']
    #allocation6 [shape = 's32[2]{0}', space=sflag, size = 0x8, scoped, tag = 'scoped memory for tpu_custom_call.1']
    #allocation7 [shape = 'u8[294912]{0}', space=vmem, size = 0x48000, scoped, tag = 'input window, operand 2, single buffered']
    #allocation8 [shape = 's32[1]{0}', space=sflag, size = 0x4, scoped, tag = 'scoped memory for tpu_custom_call.1']
    #allocation9 [shape = 'u8[65536]{0}', space=vmem, size = 0x10000, scoped, tag = 'output window, operand 0']
    #allocation10 [shape = 'u8[2048]{0}', space=vmem, size = 0x800, scoped, tag = 'output window, operand 1']
    #allocation11 [shape = 's32[2]{0}', space=sflag, size = 0x8, scoped, tag = 'scoped memory for tpu_custom_call.1']
    %13 = vsyncpa [#allocation5], 0
    %s14 = scalar_lea.sflag [#allocation5], 1
    %15 = vsyncpa %s14, 0
    %16 = vsyncpa [#allocation8], 0
    %17 = vsyncpa [#allocation6], 0
    %s18 = scalar_lea.sflag [#allocation6], 1
    %19 = vsyncpa %s18, 0
    %20 = vsyncpa [#allocation11], 0
    %s21 = scalar_lea.sflag [#allocation11], 1
    %22 = vsyncpa %s21, 0
    loop: start=0, step=1, limit=6
    $region2: #{tpu_custom_call.1} parent=1 // loop_pre_header
      _
    $region3: #{tpu_custom_call.1} parent=1 // loop_header
      %s24 = sphi 0, %s28
      %p25 = scmp.ge.s32.totalorder %s24, 6
      %s31 = sphi 0, %s43
      %s32 = sphi 0, %s39
      %s33 = sphi 0, %s31
      %s34 = sphi 0, %s32
      %s35 = sphi 0, %s33
      %s36 = sphi 0, %s34
      %s48 = sphi 0, %s50
      %s51 = sphi 0, %s48
      %s52 = sphi 0, %s51
      %s68 = sphi 0, %s52
      %s72 = sphi 0, %s72
      %s74 = sphi 0, %s72
      %s75 = sphi 0, %s74
      %s89 = sphi 0, %s75
      %s93 = sphi 0, %s93
      %s95 = sphi 0, %s93
      %s96 = sphi 0, %s95
      %s110 = sphi 0, %s96
      %s114 = sphi 0, %s114
      %s116 = sphi 0, %s114
      %s117 = sphi 0, %s116
      %s131 = sphi 0, %s117
      %s135 = sphi 0, %s135
      %s137 = sphi 0, %s135
      %s138 = sphi 0, %s137
      %s152 = sphi 0, %s138
      %s160 = sphi 0, %s162
      %s163 = sphi 0, %s160
      %s164 = sphi 0, %s163
      %s180 = sphi 0, %s164
      %s188 = sphi 0, %s190
      %s191 = sphi 0, %s188
      %s192 = sphi 0, %s191
      %s208 = sphi 0, %s192
    $region4: #{tpu_custom_call.1} parent=1 // loop_header_branch
      %27 = sbr.rel (%p25) target = $region8
    $region5: #{tpu_custom_call.1} parent=1 // loop_body
      %s29 = ssub.s32 %s24, 1
      %s30 = ssub.s32 %s24, 2
      %s37 = sadd.s32 1, %s32
      %p38 = scmp.ge.s32.totalorder %s37, 2
      %s39 = scalar_select %p38, 0, %s37
      %s40 = sadd.s32 1, %s31
      %s41 = scalar_select %p38, %s40, %s31
      %p42 = scmp.ge.s32.totalorder %s41, 2
      %s43 = scalar_select %p42, 0, %s41
      %s44 = ssub.s32 %s31, %s43
      %s45 = ssub.s32 %s32, %s39
      %s46 = sor.u32 %s44, %s45
      %p47 = scmp.eq.s32.totalorder %s46, 0
      %s49 = sadd.s32 %s48, 1
      %s50 = scalar_select %p47, %s48, %s49
      %p53 = pneg %p47
      %p54 = scmp.eq.s32.totalorder %s24, 3
      %p55 = por %p53, %p54
      %p56 = scmp.ne.s32.totalorder %s48, %s51
      %p57 = scmp.eq.s32.totalorder %s24, 0
      %p58 = por %p56, %p57
      %p59 = scmp.ne.s32.totalorder %s48, %s51
      %p60 = scmp.eq.s32.totalorder %s29, 3
      %p61 = por %p59, %p60
      %p62 = scmp.ne.s32.totalorder %s51, %s52
      %p63 = scmp.eq.s32.totalorder %s29, 0
      %p64 = por %p62, %p63
      %p65 = scmp.ne.s32.totalorder %s51, %s52
      %p66 = scmp.eq.s32.totalorder %s30, 3
      %p67 = por %p65, %p66
      %p69 = scmp.ne.s32.totalorder %s52, %s68
      %p70 = scmp.eq.s32.totalorder %s30, 0
      %p71 = por %p69, %p70
      %s73 = sadd.s32 %s72, 1
      %p76 = scmp.eq.s32.totalorder %s24, 3
      %p77 = scmp.ne.s32.totalorder %s72, %s74
      %p78 = scmp.eq.s32.totalorder %s24, 0
      %p79 = por %p77, %p78
      %p80 = scmp.ne.s32.totalorder %s72, %s74
      %p81 = scmp.eq.s32.totalorder %s29, 3
      %p82 = por %p80, %p81
      %p83 = scmp.ne.s32.totalorder %s74, %s75
      %p84 = scmp.eq.s32.totalorder %s29, 0
      %p85 = por %p83, %p84
      %p86 = scmp.ne.s32.totalorder %s74, %s75
      %p87 = scmp.eq.s32.totalorder %s30, 3
      %p88 = por %p86, %p87
      %p90 = scmp.ne.s32.totalorder %s75, %s89
      %p91 = scmp.eq.s32.totalorder %s30, 0
      %p92 = por %p90, %p91
      %s94 = sadd.s32 %s93, 1
      %p97 = scmp.eq.s32.totalorder %s24, 3
      %p98 = scmp.ne.s32.totalorder %s93, %s95
      %p99 = scmp.eq.s32.totalorder %s24, 0
      %p100 = por %p98, %p99
      %p101 = scmp.ne.s32.totalorder %s93, %s95
      %p102 = scmp.eq.s32.totalorder %s29, 3
      %p103 = por %p101, %p102
      %p104 = scmp.ne.s32.totalorder %s95, %s96
      %p105 = scmp.eq.s32.totalorder %s29, 0
      %p106 = por %p104, %p105
      %p107 = scmp.ne.s32.totalorder %s95, %s96
      %p108 = scmp.eq.s32.totalorder %s30, 3
      %p109 = por %p107, %p108
      %p111 = scmp.ne.s32.totalorder %s96, %s110
      %p112 = scmp.eq.s32.totalorder %s30, 0
      %p113 = por %p111, %p112
      %s115 = sadd.s32 %s114, 1
      %p118 = scmp.eq.s32.totalorder %s24, 3
      %p119 = scmp.ne.s32.totalorder %s114, %s116
      %p120 = scmp.eq.s32.totalorder %s24, 0
      %p121 = por %p119, %p120
      %p122 = scmp.ne.s32.totalorder %s114, %s116
      %p123 = scmp.eq.s32.totalorder %s29, 3
      %p124 = por %p122, %p123
      %p125 = scmp.ne.s32.totalorder %s116, %s117
      %p126 = scmp.eq.s32.totalorder %s29, 0
      %p127 = por %p125, %p126
      %p128 = scmp.ne.s32.totalorder %s116, %s117
      %p129 = scmp.eq.s32.totalorder %s30, 3
      %p130 = por %p128, %p129
      %p132 = scmp.ne.s32.totalorder %s117, %s131
      %p133 = scmp.eq.s32.totalorder %s30, 0
      %p134 = por %p132, %p133
      %s136 = sadd.s32 %s135, 1
      %p139 = scmp.eq.s32.totalorder %s24, 3
      %p140 = scmp.ne.s32.totalorder %s135, %s137
      %p141 = scmp.eq.s32.totalorder %s24, 0
      %p142 = por %p140, %p141
      %p143 = scmp.ne.s32.totalorder %s135, %s137
      %p144 = scmp.eq.s32.totalorder %s29, 3
      %p145 = por %p143, %p144
      %p146 = scmp.ne.s32.totalorder %s137, %s138
      %p147 = scmp.eq.s32.totalorder %s29, 0
      %p148 = por %p146, %p147
      %p149 = scmp.ne.s32.totalorder %s137, %s138
      %p150 = scmp.eq.s32.totalorder %s30, 3
      %p151 = por %p149, %p150
      %p153 = scmp.ne.s32.totalorder %s138, %s152
      %p154 = scmp.eq.s32.totalorder %s30, 0
      %p155 = por %p153, %p154
      %s156 = ssub.s32 %s31, %s43
      %s157 = ssub.s32 %s32, %s39
      %s158 = sor.u32 %s156, %s157
      %p159 = scmp.eq.s32.totalorder %s158, 0
      %s161 = sadd.s32 %s160, 1
      %s162 = scalar_select %p159, %s160, %s161
      %p165 = pneg %p159
      %p166 = scmp.eq.s32.totalorder %s24, 3
      %p167 = por %p165, %p166
      %p168 = scmp.ne.s32.totalorder %s160, %s163
      %p169 = scmp.eq.s32.totalorder %s24, 0
      %p170 = por %p168, %p169
      %p171 = scmp.ne.s32.totalorder %s160, %s163
      %p172 = scmp.eq.s32.totalorder %s29, 3
      %p173 = por %p171, %p172
      %p174 = scmp.ne.s32.totalorder %s163, %s164
      %p175 = scmp.eq.s32.totalorder %s29, 0
      %p176 = por %p174, %p175
      %p177 = scmp.ne.s32.totalorder %s163, %s164
      %p178 = scmp.eq.s32.totalorder %s30, 3
      %p179 = por %p177, %p178
      %p181 = scmp.ne.s32.totalorder %s164, %s180
      %p182 = scmp.eq.s32.totalorder %s30, 0
      %p183 = por %p181, %p182
      %s184 = ssub.s32 %s31, %s43
      %s185 = ssub.s32 %s32, %s39
      %s186 = sor.u32 %s184, %s185
      %p187 = scmp.eq.s32.totalorder %s186, 0
      %s189 = sadd.s32 %s188, 1
      %s190 = scalar_select %p187, %s188, %s189
      %p193 = pneg %p187
      %p194 = scmp.eq.s32.totalorder %s24, 3
      %p195 = por %p193, %p194
      %p196 = scmp.ne.s32.totalorder %s188, %s191
      %p197 = scmp.eq.s32.totalorder %s24, 0
      %p198 = por %p196, %p197
      %p199 = scmp.ne.s32.totalorder %s188, %s191
      %p200 = scmp.eq.s32.totalorder %s29, 3
      %p201 = por %p199, %p200
      %p202 = scmp.ne.s32.totalorder %s191, %s192
      %p203 = scmp.eq.s32.totalorder %s29, 0
      %p204 = por %p202, %p203
      %p205 = scmp.ne.s32.totalorder %s191, %s192
      %p206 = scmp.eq.s32.totalorder %s30, 3
      %p207 = por %p205, %p206
      %p209 = scmp.ne.s32.totalorder %s192, %s208
      %p210 = scmp.eq.s32.totalorder %s30, 0
      %p211 = por %p209, %p210
      %p212 = scmp.le.s32.totalorder 1, %s24
      %p213 = scmp.lt.s32.totalorder %s24, 5
      %p214 = pnand %p212, %p213
      %p215 = pneg %p214
      // Predicated region
      $region9: #{tpu_custom_call.1} parent=5 // pred_check
        _
      $region10: #{tpu_custom_call.1} parent=5 // pred_check_branch
        %217 = sbr.rel (%p214) target = $region12
      $region11: #{tpu_custom_call.1} parent=5 // pred_region
        %s218 = ssub.s32 %s24, 1
        // Predicated region
        $region13: #{tpu_custom_call.1} parent=11 // pred_check
          %p219 = pneg %p85
        $region14: #{tpu_custom_call.1} parent=11 // pred_check_branch
          %221 = sbr.rel (%p219) target = $region16
        $region15: #{tpu_custom_call.1} parent=11 // pred_region
          %223 = vsyncadd [#allocation8], 0
          %s224 = sshll.u32 %s2, 4
          %s225 = int_to_ptr.hbm [resolvable:$true] %s224
          %s226 = sshll.u32 [#allocation7], 4
          %s227 = int_to_ptr.vmem [resolvable:$true] %s226
          %232 = dma.hbm_to_vmem [thread:$0]  %s225, 9216, %s227, [#allocation8], 64, 64, 4
        $region16: #{tpu_custom_call.1} parent=11 // pred_fallthru
          _
        // Predicated region
        $region17: #{tpu_custom_call.1} parent=11 // pred_check
          %p233 = pneg %p106
        $region18: #{tpu_custom_call.1} parent=11 // pred_check_branch
          %235 = sbr.rel (%p233) target = $region20
        $region19: #{tpu_custom_call.1} parent=11 // pred_region
          _
        $region20: #{tpu_custom_call.1} parent=11 // pred_fallthru
          _
        // Predicated region
        $region21: #{tpu_custom_call.1} parent=11 // pred_check
          %p236 = pneg %p127
        $region22: #{tpu_custom_call.1} parent=11 // pred_check_branch
          %238 = sbr.rel (%p236) target = $region24
        $region23: #{tpu_custom_call.1} parent=11 // pred_region
          _
        $region24: #{tpu_custom_call.1} parent=11 // pred_fallthru
          _
        // Predicated region
        $region25: #{tpu_custom_call.1} parent=11 // pred_check
          %p239 = pneg %p148
        $region26: #{tpu_custom_call.1} parent=11 // pred_check_branch
          %241 = sbr.rel (%p239) target = $region28
        $region27: #{tpu_custom_call.1} parent=11 // pred_region
          _
        $region28: #{tpu_custom_call.1} parent=11 // pred_fallthru
          _
      $region12: #{tpu_custom_call.1} parent=5 // pred_fallthru
        _
      %p242 = scmp.lt.s32.totalorder %s24, 4
      // Predicated region
      $region29: #{tpu_custom_call.1} parent=5 // pred_check
        %p243 = pneg %p242
      $region30: #{tpu_custom_call.1} parent=5 // pred_check_branch
        %245 = sbr.rel (%p243) target = $region32
      $region31: #{tpu_custom_call.1} parent=5 // pred_region
        // Predicated region
        $region33: #{tpu_custom_call.1} parent=31 // pred_check
          %p246 = pneg %p58
        $region34: #{tpu_custom_call.1} parent=31 // pred_check_branch
          %248 = sbr.rel (%p246) target = $region36
        $region35: #{tpu_custom_call.1} parent=31 // pred_region
          %s249 = sand.u32 %s48, 1
          %s250 = scalar_lea.sflag [#allocation5], %s249
          %s251 = sand.u32 %s48, 1
          %s252 = smul.addr %s251, 64
          %s253 = scalar_lea.vmem [#allocation4], %s252
          %s254 = smul.u32 8, %s32
          %256 = vsyncadd %s250, 0
          %s257 = smul.addr %s254, 2
          %s258 = smul.addr %s31, 32
          %s259 = sadd.s32 %s257, %s258
          %s260 = smul.addr %s259, 4
          %s261 = scalar_lea.hbm %s0, %s260
          %s262 = sshll.u32 %s261, 4
          %s263 = int_to_ptr.hbm [resolvable:$true] %s262
          %s264 = sshll.u32 %s253, 4
          %s265 = int_to_ptr.vmem [resolvable:$true] %s264
          %270 = dma.hbm_to_vmem [thread:$0]  %s263, 1024, %s265, %s250, 64, 64, 4
        $region36: #{tpu_custom_call.1} parent=31 // pred_fallthru
          _
      $region32: #{tpu_custom_call.1} parent=5 // pred_fallthru
        _
      %p271 = scmp.le.s32.totalorder 1, %s24
      %p272 = scmp.lt.s32.totalorder %s24, 5
      %p273 = pnand %p271, %p272
      %p274 = pneg %p273
      // Predicated region
      $region37: #{tpu_custom_call.1} parent=5 // pred_check
        _
      $region38: #{tpu_custom_call.1} parent=5 // pred_check_branch
        %276 = sbr.rel (%p273) target = $region40
      $region39: #{tpu_custom_call.1} parent=5 // pred_region
        %s277 = ssub.s32 %s24, 1
        %s278 = sand.u32 %s51, 1
        %s279 = scalar_lea.sflag [#allocation5], %s278
        %s280 = sand.u32 %s51, 1
        %s281 = smul.addr %s280, 64
        %s282 = scalar_lea.vmem [#allocation4], %s281
        // Predicated region
        $region41: #{tpu_custom_call.1} parent=39 // pred_check
          %p283 = pneg %p64
        $region42: #{tpu_custom_call.1} parent=39 // pred_check_branch
          %285 = sbr.rel (%p283) target = $region44
        $region43: #{tpu_custom_call.1} parent=39 // pred_region
          %287 = dma.done %s279, 1024
        $region44: #{tpu_custom_call.1} parent=39 // pred_fallthru
          _
        // Predicated region
        $region45: #{tpu_custom_call.1} parent=39 // pred_check
          %p288 = pneg %p85
        $region46: #{tpu_custom_call.1} parent=39 // pred_check_branch
          %290 = sbr.rel (%p288) target = $region48
        $region47: #{tpu_custom_call.1} parent=39 // pred_region
          %292 = dma.done [#allocation8], 9216
        $region48: #{tpu_custom_call.1} parent=39 // pred_fallthru
          _
        %s293 = sand.u32 %s51, 1
        %s294 = scalar_lea.sflag [#allocation5], %s293
        %s295 = sand.u32 %s51, 1
        %s296 = smul.addr %s295, 64
        %s297 = scalar_lea.vmem [#allocation4], %s296
        %p298 = pneg %p64
        %p299 = pneg %p61
        %p300 = pneg %p85
        %p301 = pneg %p82
        %p302 = pneg %p106
        %p303 = pneg %p103
        %p304 = pneg %p127
        %p305 = pneg %p124
        %p306 = pneg %p148
        %p307 = pneg %p145
        %p308 = pneg %p176
        %p309 = pneg %p173
        %s310 = sand.u32 %s163, 1
        %s311 = scalar_lea.sflag [#allocation6], %s310
        %s312 = sand.u32 %s163, 1
        %s313 = smul.addr %s312, 64
        %s314 = scalar_lea.vmem [#allocation9], %s313
        %p315 = pneg %p204
        %p316 = pneg %p201
        %s317 = sand.u32 %s191, 1
        %s318 = scalar_lea.sflag [#allocation11], %s317
        %s319 = sand.u32 %s191, 1
        %s320 = smul.addr %s319, 2
        %s321 = scalar_lea.vmem [#allocation10], %s320
        %s322 = smul.u32 8, %s34
        %s323 = smul.u32 8, %s34
        %p324 = scmp.eq.s32.totalorder %s34, 0
        %s325 = smul.u32 %s34, 8
        %s326 = ssub.s32 %s325, 1
        %s327 = scalar_select %p324, 1, %s326
        %p328 = scmp.eq.s32.totalorder %s34, 1
        %s329 = sadd.s32 %s34, 1
        %s330 = smul.u32 %s329, 8
        %s331 = scalar_select %p328, 14, %s330
        %s332 = smul.u32 %s327, 2
        %s333 = smul.u32 %s33, 32
        %s334 = sadd.s32 %s332, %s333
        %s335 = smul.addr %s334, 4
        %s336 = scalar_lea.hbm %s1, %s335
        // Predicated region
        $region49: #{tpu_custom_call.1} parent=39 // pred_check
          _
        $region50: #{tpu_custom_call.1} parent=39 // pred_check_branch
          %338 = sbr.rel target = $region52
        $region51: #{tpu_custom_call.1} parent=39 // pred_region
          %339 = sst [smem:[#allocation14]] [#allocation13]
          %340 = sst [smem:[#allocation15]] [#allocation12]
        $region52: #{tpu_custom_call.1} parent=39 // pred_fallthru
          _
        %342 = shalt.err (0)
        %s344 = sshll.u32 %s336, 4
        %s345 = int_to_ptr.hbm [resolvable:$true] %s344
        %s346 = sshll.u32 [#allocation2], 4
        %s347 = int_to_ptr.vmem [resolvable:$true] %s346
        %349 = dma.hbm_to_vmem [thread:$0]  %s345, 128, %s347, [#allocation3]
        %s350 = smul.u32 %s331, 2
        %s351 = sadd.s32 %s350, %s333
        %s352 = smul.addr %s351, 4
        %s353 = scalar_lea.hbm %s1, %s352
        %s354 = scalar_lea.vmem [#allocation2], 8
        %s355 = scalar_lea.sflag [#allocation3], 1
        // Predicated region
        $region53: #{tpu_custom_call.1} parent=39 // pred_check
          _
        $region54: #{tpu_custom_call.1} parent=39 // pred_check_branch
          %357 = sbr.rel target = $region56
        $region55: #{tpu_custom_call.1} parent=39 // pred_region
          %358 = sst [smem:[#allocation14]] [#allocation17]
          %359 = sst [smem:[#allocation15]] [#allocation16]
        $region56: #{tpu_custom_call.1} parent=39 // pred_fallthru
          _
        %361 = shalt.err (0)
        %s363 = sshll.u32 %s353, 4
        %s364 = int_to_ptr.hbm [resolvable:$true] %s363
        %s365 = sshll.u32 %s354, 4
        %s366 = int_to_ptr.vmem [resolvable:$true] %s365
        %368 = dma.hbm_to_vmem [thread:$0]  %s364, 128, %s366, %s355
        %v369 = vld [vmem:[%s282] sm:$0xf]
        %v370 = vld [vmem:[%s282 + $0x4] sm:$0xf]
        %v371 = vld [vmem:[%s282 + $0x8] sm:$0xf]
        %v372 = vld [vmem:[%s282 + $0xc] sm:$0xf]
        %v373 = vld [vmem:[%s282 + $0x10] sm:$0xf]
        %v374 = vld [vmem:[%s282 + $0x14] sm:$0xf]
        %v375 = vld [vmem:[%s282 + $0x18] sm:$0xf]
        %v376 = vld [vmem:[%s282 + $0x1c] sm:$0xf]
        %v377 = vld [vmem:[%s282 + $0x20] sm:$0xf]
        %v378 = vld [vmem:[%s282 + $0x24] sm:$0xf]
        %v379 = vld [vmem:[%s282 + $0x28] sm:$0xf]
        %v380 = vld [vmem:[%s282 + $0x2c] sm:$0xf]
        %v381 = vld [vmem:[%s282 + $0x30] sm:$0xf]
        %v382 = vld [vmem:[%s282 + $0x34] sm:$0xf]
        %v383 = vld [vmem:[%s282 + $0x38] sm:$0xf]
        %v384 = vld [vmem:[%s282 + $0x3c] sm:$0xf]
        %v393 = vunpack.c.l.b16 %v369
        %v394 = vunpack.c.l.b16 %v371
        %v395 = vunpack.c.l.b16 %v373
        %v396 = vunpack.c.l.b16 %v375
        %v397 = vunpack.c.l.b16 %v377
        %v398 = vunpack.c.l.b16 %v379
        %v399 = vunpack.c.l.b16 %v381
        %v400 = vunpack.c.l.b16 %v383
        %v401 = vpack.c.b16 %v393, %v393
        %v402 = vpack.c.b16 %v394, %v394
        %v403 = vpack.c.b16 %v395, %v395
        %v404 = vpack.c.b16 %v396, %v396
        %v405 = vpack.c.b16 %v397, %v397
        %v406 = vpack.c.b16 %v398, %v398
        %v407 = vpack.c.b16 %v399, %v399
        %v408 = vpack.c.b16 %v400, %v400
        %v410 = vshrl.u32 %v401, 16
        %v413 = vshrl.u32 %v402, 16
        %v416 = vshrl.u32 %v403, 16
        %v419 = vshrl.u32 %v404, 16
        %v422 = vshrl.u32 %v405, 16
        %v425 = vshrl.u32 %v406, 16
        %v428 = vshrl.u32 %v407, 16
        %v431 = vshrl.u32 %v408, 16
        %v449 = vunpack.c.l.b16 %v370
        %v450 = vunpack.c.l.b16 %v372
        %v451 = vunpack.c.l.b16 %v374
        %v452 = vunpack.c.l.b16 %v376
        %v453 = vunpack.c.l.b16 %v378
        %v454 = vunpack.c.l.b16 %v380
        %v455 = vunpack.c.l.b16 %v382
        %v456 = vunpack.c.l.b16 %v384
        %v457 = vpack.c.b16 %v449, %v393
        %v458 = vpack.c.b16 %v450, %v394
        %v459 = vpack.c.b16 %v451, %v395
        %v460 = vpack.c.b16 %v452, %v396
        %v461 = vpack.c.b16 %v453, %v397
        %v462 = vpack.c.b16 %v454, %v398
        %v463 = vpack.c.b16 %v455, %v399
        %v464 = vpack.c.b16 %v456, %v400
        %v466 = vshrl.u32 %v457, 16
        %v468 = vrot.slane %v466, 7
        %v469 = vshll.u32 %v457, 16
        %v471 = vor.u32 %v468, %v469
        %v473 = vshrl.u32 %v458, 16
        %v475 = vrot.slane %v473, 7
        %v476 = vshll.u32 %v458, 16
        %v478 = vor.u32 %v475, %v476
        %v480 = vshrl.u32 %v459, 16
        %v482 = vrot.slane %v480, 7
        %v483 = vshll.u32 %v459, 16
        %v485 = vor.u32 %v482, %v483
        %v487 = vshrl.u32 %v460, 16
        %v489 = vrot.slane %v487, 7
        %v490 = vshll.u32 %v460, 16
        %v492 = vor.u32 %v489, %v490
        %v494 = vshrl.u32 %v461, 16
        %v496 = vrot.slane %v494, 7
        %v497 = vshll.u32 %v461, 16
        %v499 = vor.u32 %v496, %v497
        %v501 = vshrl.u32 %v462, 16
        %v503 = vrot.slane %v501, 7
        %v504 = vshll.u32 %v462, 16
        %v506 = vor.u32 %v503, %v504
        %v508 = vshrl.u32 %v463, 16
        %v510 = vrot.slane %v508, 7
        %v511 = vshll.u32 %v463, 16
        %v513 = vor.u32 %v510, %v511
        %v515 = vshrl.u32 %v464, 16
        %v517 = vrot.slane %v515, 7
        %v518 = vshll.u32 %v464, 16
        %v520 = vor.u32 %v517, %v518
        %v537 = vpack.c.b16 %v449, %v449
        %v538 = vpack.c.b16 %v450, %v450
        %v539 = vpack.c.b16 %v451, %v451
        %v540 = vpack.c.b16 %v452, %v452
        %v541 = vpack.c.b16 %v453, %v453
        %v542 = vpack.c.b16 %v454, %v454
        %v543 = vpack.c.b16 %v455, %v455
        %v544 = vpack.c.b16 %v456, %v456
        %v546 = vshll.u32 %v537, 16
        %v548 = vrot.slane %v546, 3
        %v550 = vshll.u32 %v538, 16
        %v552 = vrot.slane %v550, 3
        %v554 = vshll.u32 %v539, 16
        %v556 = vrot.slane %v554, 3
        %v558 = vshll.u32 %v540, 16
        %v560 = vrot.slane %v558, 3
        %v562 = vshll.u32 %v541, 16
        %v564 = vrot.slane %v562, 3
        %v566 = vshll.u32 %v542, 16
        %v568 = vrot.slane %v566, 3
        %v570 = vshll.u32 %v543, 16
        %v572 = vrot.slane %v570, 3
        %v574 = vshll.u32 %v544, 16
        %v576 = vrot.slane %v574, 3
        %vm585 = vcmask 1040384
        %vm586 = vsmask.f32 256
        %vm587 = vmand %vm585, %vm586
        %v588 = vsel %vm587, %v410, %v471
        %v589 = vsel %vm587, %v413, %v478
        %v590 = vsel %vm587, %v416, %v485
        %v591 = vsel %vm587, %v419, %v492
        %v592 = vsel %vm587, %v422, %v499
        %v593 = vsel %vm587, %v425, %v506
        %v594 = vsel %vm587, %v428, %v513
        %v595 = vsel %vm587, %v431, %v520
        %v596 = vsel %vm587, %v468, %v548
        %v597 = vsel %vm587, %v475, %v552
        %v598 = vsel %vm587, %v482, %v556
        %v599 = vsel %vm587, %v489, %v560
        %v600 = vsel %vm587, %v496, %v564
        %v601 = vsel %vm587, %v503, %v568
        %v602 = vsel %vm587, %v510, %v572
        %v603 = vsel %vm587, %v517, %v576
        %s604 = scalar_lea.vmem [#allocation7], 192
        %v605 = vld [vmem:[%s604] sm:$0xf]
        %v606 = vld [vmem:[%s604 + $0x4] sm:$0xf]
        %v607 = vld [vmem:[%s604 + $0x8] sm:$0xf]
        %v608 = vld [vmem:[%s604 + $0xc] sm:$0xf]
        %v609 = vld [vmem:[%s604 + $0x10] sm:$0xf]
        %v610 = vld [vmem:[%s604 + $0x14] sm:$0xf]
        %v611 = vld [vmem:[%s604 + $0x18] sm:$0xf]
        %v612 = vld [vmem:[%s604 + $0x1c] sm:$0xf]
        %v613 = vld [vmem:[%s604 + $0x20] sm:$0xf]
        %v614 = vld [vmem:[%s604 + $0x24] sm:$0xf]
        %v615 = vld [vmem:[%s604 + $0x28] sm:$0xf]
        %v616 = vld [vmem:[%s604 + $0x2c] sm:$0xf]
        %v617 = vld [vmem:[%s604 + $0x30] sm:$0xf]
        %v618 = vld [vmem:[%s604 + $0x34] sm:$0xf]
        %v619 = vld [vmem:[%s604 + $0x38] sm:$0xf]
        %v620 = vld [vmem:[%s604 + $0x3c] sm:$0xf]
        %vm621 = vsmask.f32 7424
        %v623 = vshrl.u32 %v588, 16
        %v625 = vshll.u32 %v588, 16
        %v627 = vrot.slane %v625, 1
        %v628 = vor.u32 %v623, %v627
        %v630 = vshll.u32 %v596, 16
        %v632 = vrot.slane %v630, 1
        %v633 = vsel %vm621, %v628, %v632
        %v635 = vshrl.u32 %v589, 16
        %v637 = vshll.u32 %v589, 16
        %v639 = vrot.slane %v637, 1
        %v640 = vor.u32 %v635, %v639
        %v642 = vshll.u32 %v597, 16
        %v644 = vrot.slane %v642, 1
        %v645 = vsel %vm621, %v640, %v644
        %v647 = vshrl.u32 %v590, 16
        %v649 = vshll.u32 %v590, 16
        %v651 = vrot.slane %v649, 1
        %v652 = vor.u32 %v647, %v651
        %v654 = vshll.u32 %v598, 16
        %v656 = vrot.slane %v654, 1
        %v657 = vsel %vm621, %v652, %v656
        %v659 = vshrl.u32 %v591, 16
        %v661 = vshll.u32 %v591, 16
        %v663 = vrot.slane %v661, 1
        %v664 = vor.u32 %v659, %v663
        %v666 = vshll.u32 %v599, 16
        %v668 = vrot.slane %v666, 1
        %v669 = vsel %vm621, %v664, %v668
        %v671 = vshrl.u32 %v592, 16
        %v673 = vshll.u32 %v592, 16
        %v675 = vrot.slane %v673, 1
        %v676 = vor.u32 %v671, %v675
        %v678 = vshll.u32 %v600, 16
        %v680 = vrot.slane %v678, 1
        %v681 = vsel %vm621, %v676, %v680
        %v683 = vshrl.u32 %v593, 16
        %v685 = vshll.u32 %v593, 16
        %v687 = vrot.slane %v685, 1
        %v688 = vor.u32 %v683, %v687
        %v690 = vshll.u32 %v601, 16
        %v692 = vrot.slane %v690, 1
        %v693 = vsel %vm621, %v688, %v692
        %v695 = vshrl.u32 %v594, 16
        %v697 = vshll.u32 %v594, 16
        %v699 = vrot.slane %v697, 1
        %v700 = vor.u32 %v695, %v699
        %v702 = vshll.u32 %v602, 16
        %v704 = vrot.slane %v702, 1
        %v705 = vsel %vm621, %v700, %v704
        %v707 = vshrl.u32 %v595, 16
        %v709 = vshll.u32 %v595, 16
        %v711 = vrot.slane %v709, 1
        %v712 = vor.u32 %v707, %v711
        %v714 = vshll.u32 %v603, 16
        %v716 = vrot.slane %v714, 1
        %v717 = vsel %vm621, %v712, %v716
        %s726 = scalar_lea.vmem [#allocation7], 256
        %v727 = vld [vmem:[%s726] sm:$0xf]
        %v728 = vld [vmem:[%s726 + $0x4] sm:$0xf]
        %v729 = vld [vmem:[%s726 + $0x8] sm:$0xf]
        %v730 = vld [vmem:[%s726 + $0xc] sm:$0xf]
        %v731 = vld [vmem:[%s726 + $0x10] sm:$0xf]
        %v732 = vld [vmem:[%s726 + $0x14] sm:$0xf]
        %v733 = vld [vmem:[%s726 + $0x18] sm:$0xf]
        %v734 = vld [vmem:[%s726 + $0x1c] sm:$0xf]
        %v735 = vld [vmem:[%s726 + $0x20] sm:$0xf]
        %v736 = vld [vmem:[%s726 + $0x24] sm:$0xf]
        %v737 = vld [vmem:[%s726 + $0x28] sm:$0xf]
        %v738 = vld [vmem:[%s726 + $0x2c] sm:$0xf]
        %v739 = vld [vmem:[%s726 + $0x30] sm:$0xf]
        %v740 = vld [vmem:[%s726 + $0x34] sm:$0xf]
        %v741 = vld [vmem:[%s726 + $0x38] sm:$0xf]
        %v742 = vld [vmem:[%s726 + $0x3c] sm:$0xf]
        %v759 = vunpack.c.l.b16 %v727
        %v760 = vunpack.c.l.b16 %v728
        %v761 = vunpack.c.l.b16 %v729
        %v762 = vunpack.c.l.b16 %v730
        %v763 = vunpack.c.l.b16 %v731
        %v764 = vunpack.c.l.b16 %v732
        %v765 = vunpack.c.l.b16 %v733
        %v766 = vunpack.c.l.b16 %v734
        %v767 = vunpack.c.l.b16 %v735
        %v768 = vunpack.c.l.b16 %v736
        %v769 = vunpack.c.l.b16 %v737
        %v770 = vunpack.c.l.b16 %v738
        %v771 = vunpack.c.l.b16 %v739
        %v772 = vunpack.c.l.b16 %v740
        %v773 = vunpack.c.l.b16 %v741
        %v774 = vunpack.c.l.b16 %v742
        %v775 = vpack.c.b16 %v760, %v759
        %v776 = vpack.c.b16 %v762, %v761
        %v777 = vpack.c.b16 %v764, %v763
        %v778 = vpack.c.b16 %v766, %v765
        %v779 = vpack.c.b16 %v768, %v767
        %v780 = vpack.c.b16 %v770, %v769
        %v781 = vpack.c.b16 %v772, %v771
        %v782 = vpack.c.b16 %v774, %v773
        %791 = vmatpush.bf16.msra.mxu0 %v782
        %792 = vmatpush.bf16.msra.mxu0 %v781
        %793 = vmatpush.bf16.msra.mxu0 %v780
        %794 = vmatpush.bf16.msra.mxu0 %v779
        %795 = vmatpush.bf16.msra.mxu0 %v778
        %796 = vmatpush.bf16.msra.mxu0 %v777
        %797 = vmatpush.bf16.msra.mxu0 %v776
        %798 = vmatpush.bf16.msra.mxu0 %v775
        %799 = vmatmul.bf16.gmra.mxu0 %v633
        %v800 = vpop.f32.mrf.mxu0
        %v801 = vadd.f32 0.0, %v800
        %v802 = vpop.f32.mrf.mxu0
        %v803 = vadd.f32 0.0, %v802
        %804 = vmatmul.bf16.gmra.mxu0 %v645
        %v805 = vpop.f32.mrf.mxu0
        %v806 = vadd.f32 0.0, %v805
        %v807 = vpop.f32.mrf.mxu0
        %v808 = vadd.f32 0.0, %v807
        %809 = vmatmul.bf16.gmra.mxu0 %v657
        %v810 = vpop.f32.mrf.mxu0
        %v811 = vadd.f32 0.0, %v810
        %v812 = vpop.f32.mrf.mxu0
        %v813 = vadd.f32 0.0, %v812
        %814 = vmatmul.bf16.gmra.mxu0 %v669
        %v815 = vpop.f32.mrf.mxu0
        %v816 = vadd.f32 0.0, %v815
        %v817 = vpop.f32.mrf.mxu0
        %v818 = vadd.f32 0.0, %v817
        %819 = vmatmul.bf16.gmra.mxu0 %v681
        %v820 = vpop.f32.mrf.mxu0
        %v821 = vadd.f32 0.0, %v820
        %v822 = vpop.f32.mrf.mxu0
        %v823 = vadd.f32 0.0, %v822
        %824 = vmatmul.bf16.gmra.mxu0 %v693
        %v825 = vpop.f32.mrf.mxu0
        %v826 = vadd.f32 0.0, %v825
        %v827 = vpop.f32.mrf.mxu0
        %v828 = vadd.f32 0.0, %v827
        %829 = vmatmul.bf16.gmra.mxu0 %v705
        %v830 = vpop.f32.mrf.mxu0
        %v831 = vadd.f32 0.0, %v830
        %v832 = vpop.f32.mrf.mxu0
        %v833 = vadd.f32 0.0, %v832
        %834 = vmatmul.bf16.gmra.mxu0 %v717
        %v835 = vpop.f32.mrf.mxu0
        %v836 = vadd.f32 0.0, %v835
        %v837 = vpop.f32.mrf.mxu0
        %v838 = vadd.f32 0.0, %v837
        %839 = vdwg.mxu0
        %v856 = vunpack.c.l.b16 %v605
        %v857 = vunpack.c.l.b16 %v606
        %v858 = vunpack.c.l.b16 %v607
        %v859 = vunpack.c.l.b16 %v608
        %v860 = vunpack.c.l.b16 %v609
        %v861 = vunpack.c.l.b16 %v610
        %v862 = vunpack.c.l.b16 %v611
        %v863 = vunpack.c.l.b16 %v612
        %v864 = vunpack.c.l.b16 %v613
        %v865 = vunpack.c.l.b16 %v614
        %v866 = vunpack.c.l.b16 %v615
        %v867 = vunpack.c.l.b16 %v616
        %v868 = vunpack.c.l.b16 %v617
        %v869 = vunpack.c.l.b16 %v618
        %v870 = vunpack.c.l.b16 %v619
        %v871 = vunpack.c.l.b16 %v620
        %v872 = vpack.c.b16 %v857, %v856
        %v873 = vpack.c.b16 %v859, %v858
        %v874 = vpack.c.b16 %v861, %v860
        %v875 = vpack.c.b16 %v863, %v862
        %v876 = vpack.c.b16 %v865, %v864
        %v877 = vpack.c.b16 %v867, %v866
        %v878 = vpack.c.b16 %v869, %v868
        %v879 = vpack.c.b16 %v871, %v870
        %888 = vmatpush.bf16.msra.mxu0 %v879
        %889 = vmatpush.bf16.msra.mxu0 %v878
        %890 = vmatpush.bf16.msra.mxu0 %v877
        %891 = vmatpush.bf16.msra.mxu0 %v876
        %892 = vmatpush.bf16.msra.mxu0 %v875
        %893 = vmatpush.bf16.msra.mxu0 %v874
        %894 = vmatpush.bf16.msra.mxu0 %v873
        %895 = vmatpush.bf16.msra.mxu0 %v872
        %896 = vmatmul.bf16.gmra.mxu0 %v588
        %v897 = vpop.f32.mrf.mxu0
        %v898 = vadd.f32 %v801, %v897
        %v899 = vpop.f32.mrf.mxu0
        %v900 = vadd.f32 %v803, %v899
        %901 = vmatmul.bf16.gmra.mxu0 %v589
        %v902 = vpop.f32.mrf.mxu0
        %v903 = vadd.f32 %v806, %v902
        %v904 = vpop.f32.mrf.mxu0
        %v905 = vadd.f32 %v808, %v904
        %906 = vmatmul.bf16.gmra.mxu0 %v590
        %v907 = vpop.f32.mrf.mxu0
        %v908 = vadd.f32 %v811, %v907
        %v909 = vpop.f32.mrf.mxu0
        %v910 = vadd.f32 %v813, %v909
        %911 = vmatmul.bf16.gmra.mxu0 %v591
        %v912 = vpop.f32.mrf.mxu0
        %v913 = vadd.f32 %v816, %v912
        %v914 = vpop.f32.mrf.mxu0
        %v915 = vadd.f32 %v818, %v914
        %916 = vmatmul.bf16.gmra.mxu0 %v592
        %v917 = vpop.f32.mrf.mxu0
        %v918 = vadd.f32 %v821, %v917
        %v919 = vpop.f32.mrf.mxu0
        %v920 = vadd.f32 %v823, %v919
        %921 = vmatmul.bf16.gmra.mxu0 %v593
        %v922 = vpop.f32.mrf.mxu0
        %v923 = vadd.f32 %v826, %v922
        %v924 = vpop.f32.mrf.mxu0
        %v925 = vadd.f32 %v828, %v924
        %926 = vmatmul.bf16.gmra.mxu0 %v594
        %v927 = vpop.f32.mrf.mxu0
        %v928 = vadd.f32 %v831, %v927
        %v929 = vpop.f32.mrf.mxu0
        %v930 = vadd.f32 %v833, %v929
        %931 = vmatmul.bf16.gmra.mxu0 %v595
        %v932 = vpop.f32.mrf.mxu0
        %v933 = vadd.f32 %v836, %v932
        %v934 = vpop.f32.mrf.mxu0
        %v935 = vadd.f32 %v838, %v934
        %936 = vdwg.mxu0
        %vm953 = vcmask 1046528
        %v954 = vrot.slane %v588, 1
        %v955 = vrot.slane %v596, 1
        %v956 = vsel %vm953, %v954, %v955
        %v957 = vrot.slane %v589, 1
        %v958 = vrot.slane %v597, 1
        %v959 = vsel %vm953, %v957, %v958
        %v960 = vrot.slane %v590, 1
        %v961 = vrot.slane %v598, 1
        %v962 = vsel %vm953, %v960, %v961
        %v963 = vrot.slane %v591, 1
        %v964 = vrot.slane %v599, 1
        %v965 = vsel %vm953, %v963, %v964
        %v966 = vrot.slane %v592, 1
        %v967 = vrot.slane %v600, 1
        %v968 = vsel %vm953, %v966, %v967
        %v969 = vrot.slane %v593, 1
        %v970 = vrot.slane %v601, 1
        %v971 = vsel %vm953, %v969, %v970
        %v972 = vrot.slane %v594, 1
        %v973 = vrot.slane %v602, 1
        %v974 = vsel %vm953, %v972, %v973
        %v975 = vrot.slane %v595, 1
        %v976 = vrot.slane %v603, 1
        %v977 = vsel %vm953, %v975, %v976
        %s986 = scalar_lea.vmem [#allocation7], 320
        %v987 = vld [vmem:[%s986] sm:$0xf]
        %v988 = vld [vmem:[%s986 + $0x4] sm:$0xf]
        %v989 = vld [vmem:[%s986 + $0x8] sm:$0xf]
        %v990 = vld [vmem:[%s986 + $0xc] sm:$0xf]
        %v991 = vld [vmem:[%s986 + $0x10] sm:$0xf]
        %v992 = vld [vmem:[%s986 + $0x14] sm:$0xf]
        %v993 = vld [vmem:[%s986 + $0x18] sm:$0xf]
        %v994 = vld [vmem:[%s986 + $0x1c] sm:$0xf]
        %v995 = vld [vmem:[%s986 + $0x20] sm:$0xf]
        %v996 = vld [vmem:[%s986 + $0x24] sm:$0xf]
        %v997 = vld [vmem:[%s986 + $0x28] sm:$0xf]
        %v998 = vld [vmem:[%s986 + $0x2c] sm:$0xf]
        %v999 = vld [vmem:[%s986 + $0x30] sm:$0xf]
        %v1000 = vld [vmem:[%s986 + $0x34] sm:$0xf]
        %v1001 = vld [vmem:[%s986 + $0x38] sm:$0xf]
        %v1002 = vld [vmem:[%s986 + $0x3c] sm:$0xf]
        %v1019 = vunpack.c.l.b16 %v987
        %v1020 = vunpack.c.l.b16 %v988
        %v1021 = vunpack.c.l.b16 %v989
        %v1022 = vunpack.c.l.b16 %v990
        %v1023 = vunpack.c.l.b16 %v991
        %v1024 = vunpack.c.l.b16 %v992
        %v1025 = vunpack.c.l.b16 %v993
        %v1026 = vunpack.c.l.b16 %v994
        %v1027 = vunpack.c.l.b16 %v995
        %v1028 = vunpack.c.l.b16 %v996
        %v1029 = vunpack.c.l.b16 %v997
        %v1030 = vunpack.c.l.b16 %v998
        %v1031 = vunpack.c.l.b16 %v999
        %v1032 = vunpack.c.l.b16 %v1000
        %v1033 = vunpack.c.l.b16 %v1001
        %v1034 = vunpack.c.l.b16 %v1002
        %v1035 = vpack.c.b16 %v1020, %v1019
        %v1036 = vpack.c.b16 %v1022, %v1021
        %v1037 = vpack.c.b16 %v1024, %v1023
        %v1038 = vpack.c.b16 %v1026, %v1025
        %v1039 = vpack.c.b16 %v1028, %v1027
        %v1040 = vpack.c.b16 %v1030, %v1029
        %v1041 = vpack.c.b16 %v1032, %v1031
        %v1042 = vpack.c.b16 %v1034, %v1033
        %1051 = vmatpush.bf16.msra.mxu0 %v1042
        %1052 = vmatpush.bf16.msra.mxu0 %v1041
        %1053 = vmatpush.bf16.msra.mxu0 %v1040
        %1054 = vmatpush.bf16.msra.mxu0 %v1039
        %1055 = vmatpush.bf16.msra.mxu0 %v1038
        %1056 = vmatpush.bf16.msra.mxu0 %v1037
        %1057 = vmatpush.bf16.msra.mxu0 %v1036
        %1058 = vmatpush.bf16.msra.mxu0 %v1035
        %1059 = vmatmul.bf16.gmra.mxu0 %v956
        %v1060 = vpop.f32.mrf.mxu0
        %v1061 = vadd.f32 0.0, %v1060
        %v1062 = vpop.f32.mrf.mxu0
        %v1063 = vadd.f32 0.0, %v1062
        %1064 = vmatmul.bf16.gmra.mxu0 %v959
        %v1065 = vpop.f32.mrf.mxu0
        %v1066 = vadd.f32 0.0, %v1065
        %v1067 = vpop.f32.mrf.mxu0
        %v1068 = vadd.f32 0.0, %v1067
        %1069 = vmatmul.bf16.gmra.mxu0 %v962
        %v1070 = vpop.f32.mrf.mxu0
        %v1071 = vadd.f32 0.0, %v1070
        %v1072 = vpop.f32.mrf.mxu0
        %v1073 = vadd.f32 0.0, %v1072
        %1074 = vmatmul.bf16.gmra.mxu0 %v965
        %v1075 = vpop.f32.mrf.mxu0
        %v1076 = vadd.f32 0.0, %v1075
        %v1077 = vpop.f32.mrf.mxu0
        %v1078 = vadd.f32 0.0, %v1077
        %1079 = vmatmul.bf16.gmra.mxu0 %v968
        %v1080 = vpop.f32.mrf.mxu0
        %v1081 = vadd.f32 0.0, %v1080
        %v1082 = vpop.f32.mrf.mxu0
        %v1083 = vadd.f32 0.0, %v1082
        %1084 = vmatmul.bf16.gmra.mxu0 %v971
        %v1085 = vpop.f32.mrf.mxu0
        %v1086 = vadd.f32 0.0, %v1085
        %v1087 = vpop.f32.mrf.mxu0
        %v1088 = vadd.f32 0.0, %v1087
        %1089 = vmatmul.bf16.gmra.mxu0 %v974
        %v1090 = vpop.f32.mrf.mxu0
        %v1091 = vadd.f32 0.0, %v1090
        %v1092 = vpop.f32.mrf.mxu0
        %v1093 = vadd.f32 0.0, %v1092
        %1094 = vmatmul.bf16.gmra.mxu0 %v977
        %v1095 = vpop.f32.mrf.mxu0
        %v1096 = vadd.f32 0.0, %v1095
        %v1097 = vpop.f32.mrf.mxu0
        %v1098 = vadd.f32 0.0, %v1097
        %1099 = vdwg.mxu0
        %v1100 = vadd.f32 %v898, %v1061
        %v1101 = vadd.f32 %v900, %v1063
        %v1102 = vadd.f32 %v903, %v1066
        %v1103 = vadd.f32 %v905, %v1068
        %v1104 = vadd.f32 %v908, %v1071
        %v1105 = vadd.f32 %v910, %v1073
        %v1106 = vadd.f32 %v913, %v1076
        %v1107 = vadd.f32 %v915, %v1078
        %v1108 = vadd.f32 %v918, %v1081
        %v1109 = vadd.f32 %v920, %v1083
        %v1110 = vadd.f32 %v923, %v1086
        %v1111 = vadd.f32 %v925, %v1088
        %v1112 = vadd.f32 %v928, %v1091
        %v1113 = vadd.f32 %v930, %v1093
        %v1114 = vadd.f32 %v933, %v1096
        %v1115 = vadd.f32 %v935, %v1098
        %s1116 = smul.u32 4, 2
        %s1117 = smul.u32 %s1116, 1
        %s1118 = sshll.u32 %s1117, 4
        %1119 = dma.done [#allocation3], %s1118
        %s1120 = sshll.u32 %s1117, 4
        %1121 = dma.done %s355, %s1120
        %v1122 = vld [vmem:[#allocation2] sm:$0xf]
        %v1123 = vld [vmem:[#allocation2 + $0x4] sm:$0xf]
        %v1124 = vld [vmem:[#allocation2 + $0x8] sm:$0xf]
        %v1125 = vld [vmem:[#allocation2 + $0xc] sm:$0xf]
        %v1128 = vunpack.c.l.b16 %v1122
        %v1129 = vunpack.c.l.b16 %v1124
        %v1130 = vpack.c.b16 %v1128, %v1128
        %v1131 = vpack.c.b16 %v1129, %v1129
        %v1133 = vshrl.u32 %v1130, 16
        %v1136 = vshrl.u32 %v1131, 16
        %v1142 = vunpack.c.l.b16 %v1123
        %v1143 = vunpack.c.l.b16 %v1125
        %v1144 = vpack.c.b16 %v1142, %v1128
        %v1145 = vpack.c.b16 %v1143, %v1129
        %v1147 = vshrl.u32 %v1144, 16
        %v1149 = vrot.slane %v1147, 7
        %v1150 = vshll.u32 %v1144, 16
        %v1152 = vor.u32 %v1149, %v1150
        %v1154 = vshrl.u32 %v1145, 16
        %v1156 = vrot.slane %v1154, 7
        %v1157 = vshll.u32 %v1145, 16
        %v1159 = vor.u32 %v1156, %v1157
        %v1164 = vpack.c.b16 %v1142, %v1142
        %v1165 = vpack.c.b16 %v1143, %v1143
        %v1167 = vshll.u32 %v1164, 16
        %v1169 = vrot.slane %v1167, 3
        %v1171 = vshll.u32 %v1165, 16
        %v1173 = vrot.slane %v1171, 3
        %v1176 = vsel %vm587, %v1133, %v1152
        %v1177 = vsel %vm587, %v1136, %v1159
        %v1178 = vsel %vm587, %v1149, %v1169
        %v1179 = vsel %vm587, %v1156, %v1173
        %v1180 = vld [vmem:[#allocation7] sm:$0xf]
        %v1181 = vld [vmem:[#allocation7 + $0x4] sm:$0xf]
        %v1182 = vld [vmem:[#allocation7 + $0x8] sm:$0xf]
        %v1183 = vld [vmem:[#allocation7 + $0xc] sm:$0xf]
        %v1184 = vld [vmem:[#allocation7 + $0x10] sm:$0xf]
        %v1185 = vld [vmem:[#allocation7 + $0x14] sm:$0xf]
        %v1186 = vld [vmem:[#allocation7 + $0x18] sm:$0xf]
        %v1187 = vld [vmem:[#allocation7 + $0x1c] sm:$0xf]
        %v1188 = vld [vmem:[#allocation7 + $0x20] sm:$0xf]
        %v1189 = vld [vmem:[#allocation7 + $0x24] sm:$0xf]
        %v1190 = vld [vmem:[#allocation7 + $0x28] sm:$0xf]
        %v1191 = vld [vmem:[#allocation7 + $0x2c] sm:$0xf]
        %v1192 = vld [vmem:[#allocation7 + $0x30] sm:$0xf]
        %v1193 = vld [vmem:[#allocation7 + $0x34] sm:$0xf]
        %v1194 = vld [vmem:[#allocation7 + $0x38] sm:$0xf]
        %v1195 = vld [vmem:[#allocation7 + $0x3c] sm:$0xf]
        %v1197 = vshrl.u32 %v1176, 16
        %v1199 = vshll.u32 %v1176, 16
        %v1201 = vrot.slane %v1199, 1
        %v1202 = vor.u32 %v1197, %v1201
        %v1204 = vshll.u32 %v1178, 16
        %v1206 = vrot.slane %v1204, 1
        %v1207 = vsel %vm621, %v1202, %v1206
        %s1209 = scalar_lea.vmem [#allocation7], 64
        %v1210 = vld [vmem:[%s1209] sm:$0xf]
        %v1211 = vld [vmem:[%s1209 + $0x4] sm:$0xf]
        %v1212 = vld [vmem:[%s1209 + $0x8] sm:$0xf]
        %v1213 = vld [vmem:[%s1209 + $0xc] sm:$0xf]
        %v1214 = vld [vmem:[%s1209 + $0x10] sm:$0xf]
        %v1215 = vld [vmem:[%s1209 + $0x14] sm:$0xf]
        %v1216 = vld [vmem:[%s1209 + $0x18] sm:$0xf]
        %v1217 = vld [vmem:[%s1209 + $0x1c] sm:$0xf]
        %v1218 = vld [vmem:[%s1209 + $0x20] sm:$0xf]
        %v1219 = vld [vmem:[%s1209 + $0x24] sm:$0xf]
        %v1220 = vld [vmem:[%s1209 + $0x28] sm:$0xf]
        %v1221 = vld [vmem:[%s1209 + $0x2c] sm:$0xf]
        %v1222 = vld [vmem:[%s1209 + $0x30] sm:$0xf]
        %v1223 = vld [vmem:[%s1209 + $0x34] sm:$0xf]
        %v1224 = vld [vmem:[%s1209 + $0x38] sm:$0xf]
        %v1225 = vld [vmem:[%s1209 + $0x3c] sm:$0xf]
        %v1242 = vunpack.c.l.b16 %v1210
        %v1243 = vunpack.c.l.b16 %v1211
        %v1244 = vunpack.c.l.b16 %v1212
        %v1245 = vunpack.c.l.b16 %v1213
        %v1246 = vunpack.c.l.b16 %v1214
        %v1247 = vunpack.c.l.b16 %v1215
        %v1248 = vunpack.c.l.b16 %v1216
        %v1249 = vunpack.c.l.b16 %v1217
        %v1250 = vunpack.c.l.b16 %v1218
        %v1251 = vunpack.c.l.b16 %v1219
        %v1252 = vunpack.c.l.b16 %v1220
        %v1253 = vunpack.c.l.b16 %v1221
        %v1254 = vunpack.c.l.b16 %v1222
        %v1255 = vunpack.c.l.b16 %v1223
        %v1256 = vunpack.c.l.b16 %v1224
        %v1257 = vunpack.c.l.b16 %v1225
        %v1258 = vpack.c.b16 %v1243, %v1242
        %v1259 = vpack.c.b16 %v1245, %v1244
        %v1260 = vpack.c.b16 %v1247, %v1246
        %v1261 = vpack.c.b16 %v1249, %v1248
        %v1262 = vpack.c.b16 %v1251, %v1250
        %v1263 = vpack.c.b16 %v1253, %v1252
        %v1264 = vpack.c.b16 %v1255, %v1254
        %v1265 = vpack.c.b16 %v1257, %v1256
        %1274 = vmatpush.bf16.msra.mxu0 %v1265
        %1275 = vmatpush.bf16.msra.mxu0 %v1264
        %1276 = vmatpush.bf16.msra.mxu0 %v1263
        %1277 = vmatpush.bf16.msra.mxu0 %v1262
        %1278 = vmatpush.bf16.msra.mxu0 %v1261
        %1279 = vmatpush.bf16.msra.mxu0 %v1260
        %1280 = vmatpush.bf16.msra.mxu0 %v1259
        %1281 = vmatpush.bf16.msra.mxu0 %v1258
        %1282 = vmatmul.bf16.gmra.mxu0 %v1207
        %v1283 = vpop.f32.mrf.mxu0
        %v1284 = vadd.f32 0.0, %v1283
        %v1285 = vpop.f32.mrf.mxu0
        %v1286 = vadd.f32 0.0, %v1285
        %1287 = vmatmul.bf16.gmra.mxu0 %v633
        %v1288 = vpop.f32.mrf.mxu0
        %v1289 = vadd.f32 0.0, %v1288
        %v1290 = vpop.f32.mrf.mxu0
        %v1291 = vadd.f32 0.0, %v1290
        %1292 = vmatmul.bf16.gmra.mxu0 %v645
        %v1293 = vpop.f32.mrf.mxu0
        %v1294 = vadd.f32 0.0, %v1293
        %v1295 = vpop.f32.mrf.mxu0
        %v1296 = vadd.f32 0.0, %v1295
        %1297 = vmatmul.bf16.gmra.mxu0 %v657
        %v1298 = vpop.f32.mrf.mxu0
        %v1299 = vadd.f32 0.0, %v1298
        %v1300 = vpop.f32.mrf.mxu0
        %v1301 = vadd.f32 0.0, %v1300
        %1302 = vmatmul.bf16.gmra.mxu0 %v669
        %v1303 = vpop.f32.mrf.mxu0
        %v1304 = vadd.f32 0.0, %v1303
        %v1305 = vpop.f32.mrf.mxu0
        %v1306 = vadd.f32 0.0, %v1305
        %1307 = vmatmul.bf16.gmra.mxu0 %v681
        %v1308 = vpop.f32.mrf.mxu0
        %v1309 = vadd.f32 0.0, %v1308
        %v1310 = vpop.f32.mrf.mxu0
        %v1311 = vadd.f32 0.0, %v1310
        %1312 = vmatmul.bf16.gmra.mxu0 %v693
        %v1313 = vpop.f32.mrf.mxu0
        %v1314 = vadd.f32 0.0, %v1313
        %v1315 = vpop.f32.mrf.mxu0
        %v1316 = vadd.f32 0.0, %v1315
        %1317 = vmatmul.bf16.gmra.mxu0 %v705
        %v1318 = vpop.f32.mrf.mxu0
        %v1319 = vadd.f32 0.0, %v1318
        %v1320 = vpop.f32.mrf.mxu0
        %v1321 = vadd.f32 0.0, %v1320
        %1322 = vdwg.mxu0
        %v1339 = vunpack.c.l.b16 %v1180
        %v1340 = vunpack.c.l.b16 %v1181
        %v1341 = vunpack.c.l.b16 %v1182
        %v1342 = vunpack.c.l.b16 %v1183
        %v1343 = vunpack.c.l.b16 %v1184
        %v1344 = vunpack.c.l.b16 %v1185
        %v1345 = vunpack.c.l.b16 %v1186
        %v1346 = vunpack.c.l.b16 %v1187
        %v1347 = vunpack.c.l.b16 %v1188
        %v1348 = vunpack.c.l.b16 %v1189
        %v1349 = vunpack.c.l.b16 %v1190
        %v1350 = vunpack.c.l.b16 %v1191
        %v1351 = vunpack.c.l.b16 %v1192
        %v1352 = vunpack.c.l.b16 %v1193
        %v1353 = vunpack.c.l.b16 %v1194
        %v1354 = vunpack.c.l.b16 %v1195
        %v1355 = vpack.c.b16 %v1340, %v1339
        %v1356 = vpack.c.b16 %v1342, %v1341
        %v1357 = vpack.c.b16 %v1344, %v1343
        %v1358 = vpack.c.b16 %v1346, %v1345
        %v1359 = vpack.c.b16 %v1348, %v1347
        %v1360 = vpack.c.b16 %v1350, %v1349
        %v1361 = vpack.c.b16 %v1352, %v1351
        %v1362 = vpack.c.b16 %v1354, %v1353
        %1371 = vmatpush.bf16.msra.mxu0 %v1362
        %1372 = vmatpush.bf16.msra.mxu0 %v1361
        %1373 = vmatpush.bf16.msra.mxu0 %v1360
        %1374 = vmatpush.bf16.msra.mxu0 %v1359
        %1375 = vmatpush.bf16.msra.mxu0 %v1358
        %1376 = vmatpush.bf16.msra.mxu0 %v1357
        %1377 = vmatpush.bf16.msra.mxu0 %v1356
        %1378 = vmatpush.bf16.msra.mxu0 %v1355
        %1379 = vmatmul.bf16.gmra.mxu0 %v1176
        %v1380 = vpop.f32.mrf.mxu0
        %v1381 = vadd.f32 %v1284, %v1380
        %v1382 = vpop.f32.mrf.mxu0
        %v1383 = vadd.f32 %v1286, %v1382
        %1384 = vmatmul.bf16.gmra.mxu0 %v588
        %v1385 = vpop.f32.mrf.mxu0
        %v1386 = vadd.f32 %v1289, %v1385
        %v1387 = vpop.f32.mrf.mxu0
        %v1388 = vadd.f32 %v1291, %v1387
        %1389 = vmatmul.bf16.gmra.mxu0 %v589
        %v1390 = vpop.f32.mrf.mxu0
        %v1391 = vadd.f32 %v1294, %v1390
        %v1392 = vpop.f32.mrf.mxu0
        %v1393 = vadd.f32 %v1296, %v1392
        %1394 = vmatmul.bf16.gmra.mxu0 %v590
        %v1395 = vpop.f32.mrf.mxu0
        %v1396 = vadd.f32 %v1299, %v1395
        %v1397 = vpop.f32.mrf.mxu0
        %v1398 = vadd.f32 %v1301, %v1397
        %1399 = vmatmul.bf16.gmra.mxu0 %v591
        %v1400 = vpop.f32.mrf.mxu0
        %v1401 = vadd.f32 %v1304, %v1400
        %v1402 = vpop.f32.mrf.mxu0
        %v1403 = vadd.f32 %v1306, %v1402
        %1404 = vmatmul.bf16.gmra.mxu0 %v592
        %v1405 = vpop.f32.mrf.mxu0
        %v1406 = vadd.f32 %v1309, %v1405
        %v1407 = vpop.f32.mrf.mxu0
        %v1408 = vadd.f32 %v1311, %v1407
        %1409 = vmatmul.bf16.gmra.mxu0 %v593
        %v1410 = vpop.f32.mrf.mxu0
        %v1411 = vadd.f32 %v1314, %v1410
        %v1412 = vpop.f32.mrf.mxu0
        %v1413 = vadd.f32 %v1316, %v1412
        %1414 = vmatmul.bf16.gmra.mxu0 %v594
        %v1415 = vpop.f32.mrf.mxu0
        %v1416 = vadd.f32 %v1319, %v1415
        %v1417 = vpop.f32.mrf.mxu0
        %v1418 = vadd.f32 %v1321, %v1417
        %1419 = vdwg.mxu0
        %v1422 = vrot.slane %v1176, 1
        %v1423 = vrot.slane %v1178, 1
        %v1424 = vsel %vm953, %v1422, %v1423
        %s1426 = scalar_lea.vmem [#allocation7], 128
        %v1427 = vld [vmem:[%s1426] sm:$0xf]
        %v1428 = vld [vmem:[%s1426 + $0x4] sm:$0xf]
        %v1429 = vld [vmem:[%s1426 + $0x8] sm:$0xf]
        %v1430 = vld [vmem:[%s1426 + $0xc] sm:$0xf]
        %v1431 = vld [vmem:[%s1426 + $0x10] sm:$0xf]
        %v1432 = vld [vmem:[%s1426 + $0x14] sm:$0xf]
        %v1433 = vld [vmem:[%s1426 + $0x18] sm:$0xf]
        %v1434 = vld [vmem:[%s1426 + $0x1c] sm:$0xf]
        %v1435 = vld [vmem:[%s1426 + $0x20] sm:$0xf]
        %v1436 = vld [vmem:[%s1426 + $0x24] sm:$0xf]
        %v1437 = vld [vmem:[%s1426 + $0x28] sm:$0xf]
        %v1438 = vld [vmem:[%s1426 + $0x2c] sm:$0xf]
        %v1439 = vld [vmem:[%s1426 + $0x30] sm:$0xf]
        %v1440 = vld [vmem:[%s1426 + $0x34] sm:$0xf]
        %v1441 = vld [vmem:[%s1426 + $0x38] sm:$0xf]
        %v1442 = vld [vmem:[%s1426 + $0x3c] sm:$0xf]
        %v1459 = vunpack.c.l.b16 %v1427
        %v1460 = vunpack.c.l.b16 %v1428
        %v1461 = vunpack.c.l.b16 %v1429
        %v1462 = vunpack.c.l.b16 %v1430
        %v1463 = vunpack.c.l.b16 %v1431
        %v1464 = vunpack.c.l.b16 %v1432
        %v1465 = vunpack.c.l.b16 %v1433
        %v1466 = vunpack.c.l.b16 %v1434
        %v1467 = vunpack.c.l.b16 %v1435
        %v1468 = vunpack.c.l.b16 %v1436
        %v1469 = vunpack.c.l.b16 %v1437
        %v1470 = vunpack.c.l.b16 %v1438
        %v1471 = vunpack.c.l.b16 %v1439
        %v1472 = vunpack.c.l.b16 %v1440
        %v1473 = vunpack.c.l.b16 %v1441
        %v1474 = vunpack.c.l.b16 %v1442
        %v1475 = vpack.c.b16 %v1460, %v1459
        %v1476 = vpack.c.b16 %v1462, %v1461
        %v1477 = vpack.c.b16 %v1464, %v1463
        %v1478 = vpack.c.b16 %v1466, %v1465
        %v1479 = vpack.c.b16 %v1468, %v1467
        %v1480 = vpack.c.b16 %v1470, %v1469
        %v1481 = vpack.c.b16 %v1472, %v1471
        %v1482 = vpack.c.b16 %v1474, %v1473
        %1491 = vmatpush.bf16.msra.mxu0 %v1482
        %1492 = vmatpush.bf16.msra.mxu0 %v1481
        %1493 = vmatpush.bf16.msra.mxu0 %v1480
        %1494 = vmatpush.bf16.msra.mxu0 %v1479
        %1495 = vmatpush.bf16.msra.mxu0 %v1478
        %1496 = vmatpush.bf16.msra.mxu0 %v1477
        %1497 = vmatpush.bf16.msra.mxu0 %v1476
        %1498 = vmatpush.bf16.msra.mxu0 %v1475
        %1499 = vmatmul.bf16.gmra.mxu0 %v1424
        %v1500 = vpop.f32.mrf.mxu0
        %v1501 = vadd.f32 0.0, %v1500
        %v1502 = vpop.f32.mrf.mxu0
        %v1503 = vadd.f32 0.0, %v1502
        %1504 = vmatmul.bf16.gmra.mxu0 %v956
        %v1505 = vpop.f32.mrf.mxu0
        %v1506 = vadd.f32 0.0, %v1505
        %v1507 = vpop.f32.mrf.mxu0
        %v1508 = vadd.f32 0.0, %v1507
        %1509 = vmatmul.bf16.gmra.mxu0 %v959
        %v1510 = vpop.f32.mrf.mxu0
        %v1511 = vadd.f32 0.0, %v1510
        %v1512 = vpop.f32.mrf.mxu0
        %v1513 = vadd.f32 0.0, %v1512
        %1514 = vmatmul.bf16.gmra.mxu0 %v962
        %v1515 = vpop.f32.mrf.mxu0
        %v1516 = vadd.f32 0.0, %v1515
        %v1517 = vpop.f32.mrf.mxu0
        %v1518 = vadd.f32 0.0, %v1517
        %1519 = vmatmul.bf16.gmra.mxu0 %v965
        %v1520 = vpop.f32.mrf.mxu0
        %v1521 = vadd.f32 0.0, %v1520
        %v1522 = vpop.f32.mrf.mxu0
        %v1523 = vadd.f32 0.0, %v1522
        %1524 = vmatmul.bf16.gmra.mxu0 %v968
        %v1525 = vpop.f32.mrf.mxu0
        %v1526 = vadd.f32 0.0, %v1525
        %v1527 = vpop.f32.mrf.mxu0
        %v1528 = vadd.f32 0.0, %v1527
        %1529 = vmatmul.bf16.gmra.mxu0 %v971
        %v1530 = vpop.f32.mrf.mxu0
        %v1531 = vadd.f32 0.0, %v1530
        %v1532 = vpop.f32.mrf.mxu0
        %v1533 = vadd.f32 0.0, %v1532
        %1534 = vmatmul.bf16.gmra.mxu0 %v974
        %v1535 = vpop.f32.mrf.mxu0
        %v1536 = vadd.f32 0.0, %v1535
        %v1537 = vpop.f32.mrf.mxu0
        %v1538 = vadd.f32 0.0, %v1537
        %1539 = vdwg.mxu0
        %v1540 = vadd.f32 %v1381, %v1501
        %v1541 = vadd.f32 %v1383, %v1503
        %v1542 = vadd.f32 %v1386, %v1506
        %v1543 = vadd.f32 %v1388, %v1508
        %v1544 = vadd.f32 %v1391, %v1511
        %v1545 = vadd.f32 %v1393, %v1513
        %v1546 = vadd.f32 %v1396, %v1516
        %v1547 = vadd.f32 %v1398, %v1518
        %v1548 = vadd.f32 %v1401, %v1521
        %v1549 = vadd.f32 %v1403, %v1523
        %v1550 = vadd.f32 %v1406, %v1526
        %v1551 = vadd.f32 %v1408, %v1528
        %v1552 = vadd.f32 %v1411, %v1531
        %v1553 = vadd.f32 %v1413, %v1533
        %v1554 = vadd.f32 %v1416, %v1536
        %v1555 = vadd.f32 %v1418, %v1538
        %v1556 = vadd.f32 %v1100, %v1540
        %v1557 = vadd.f32 %v1101, %v1541
        %v1558 = vadd.f32 %v1102, %v1542
        %v1559 = vadd.f32 %v1103, %v1543
        %v1560 = vadd.f32 %v1104, %v1544
        %v1561 = vadd.f32 %v1105, %v1545
        %v1562 = vadd.f32 %v1106, %v1546
        %v1563 = vadd.f32 %v1107, %v1547
        %v1564 = vadd.f32 %v1108, %v1548
        %v1565 = vadd.f32 %v1109, %v1549
        %v1566 = vadd.f32 %v1110, %v1550
        %v1567 = vadd.f32 %v1111, %v1551
        %v1568 = vadd.f32 %v1112, %v1552
        %v1569 = vadd.f32 %v1113, %v1553
        %v1570 = vadd.f32 %v1114, %v1554
        %v1571 = vadd.f32 %v1115, %v1555
        %s1572 = scalar_lea.vmem [#allocation7], 384
        %v1573 = vld [vmem:[%s1572] sm:$0xf]
        %v1574 = vld [vmem:[%s1572 + $0x4] sm:$0xf]
        %v1575 = vld [vmem:[%s1572 + $0x8] sm:$0xf]
        %v1576 = vld [vmem:[%s1572 + $0xc] sm:$0xf]
        %v1577 = vld [vmem:[%s1572 + $0x10] sm:$0xf]
        %v1578 = vld [vmem:[%s1572 + $0x14] sm:$0xf]
        %v1579 = vld [vmem:[%s1572 + $0x18] sm:$0xf]
        %v1580 = vld [vmem:[%s1572 + $0x1c] sm:$0xf]
        %v1581 = vld [vmem:[%s1572 + $0x20] sm:$0xf]
        %v1582 = vld [vmem:[%s1572 + $0x24] sm:$0xf]
        %v1583 = vld [vmem:[%s1572 + $0x28] sm:$0xf]
        %v1584 = vld [vmem:[%s1572 + $0x2c] sm:$0xf]
        %v1585 = vld [vmem:[%s1572 + $0x30] sm:$0xf]
        %v1586 = vld [vmem:[%s1572 + $0x34] sm:$0xf]
        %v1587 = vld [vmem:[%s1572 + $0x38] sm:$0xf]
        %v1588 = vld [vmem:[%s1572 + $0x3c] sm:$0xf]
        %v1590 = vshrl.u32 %v1177, 16
        %v1592 = vshll.u32 %v1177, 16
        %v1594 = vrot.slane %v1592, 1
        %v1595 = vor.u32 %v1590, %v1594
        %v1597 = vshll.u32 %v1179, 16
        %v1599 = vrot.slane %v1597, 1
        %v1600 = vsel %vm621, %v1595, %v1599
        %s1602 = scalar_lea.vmem [#allocation7], 448
        %v1603 = vld [vmem:[%s1602] sm:$0xf]
        %v1604 = vld [vmem:[%s1602 + $0x4] sm:$0xf]
        %v1605 = vld [vmem:[%s1602 + $0x8] sm:$0xf]
        %v1606 = vld [vmem:[%s1602 + $0xc] sm:$0xf]
        %v1607 = vld [vmem:[%s1602 + $0x10] sm:$0xf]
        %v1608 = vld [vmem:[%s1602 + $0x14] sm:$0xf]
        %v1609 = vld [vmem:[%s1602 + $0x18] sm:$0xf]
        %v1610 = vld [vmem:[%s1602 + $0x1c] sm:$0xf]
        %v1611 = vld [vmem:[%s1602 + $0x20] sm:$0xf]
        %v1612 = vld [vmem:[%s1602 + $0x24] sm:$0xf]
        %v1613 = vld [vmem:[%s1602 + $0x28] sm:$0xf]
        %v1614 = vld [vmem:[%s1602 + $0x2c] sm:$0xf]
        %v1615 = vld [vmem:[%s1602 + $0x30] sm:$0xf]
        %v1616 = vld [vmem:[%s1602 + $0x34] sm:$0xf]
        %v1617 = vld [vmem:[%s1602 + $0x38] sm:$0xf]
        %v1618 = vld [vmem:[%s1602 + $0x3c] sm:$0xf]
        %v1635 = vunpack.c.l.b16 %v1603
        %v1636 = vunpack.c.l.b16 %v1604
        %v1637 = vunpack.c.l.b16 %v1605
        %v1638 = vunpack.c.l.b16 %v1606
        %v1639 = vunpack.c.l.b16 %v1607
        %v1640 = vunpack.c.l.b16 %v1608
        %v1641 = vunpack.c.l.b16 %v1609
        %v1642 = vunpack.c.l.b16 %v1610
        %v1643 = vunpack.c.l.b16 %v1611
        %v1644 = vunpack.c.l.b16 %v1612
        %v1645 = vunpack.c.l.b16 %v1613
        %v1646 = vunpack.c.l.b16 %v1614
        %v1647 = vunpack.c.l.b16 %v1615
        %v1648 = vunpack.c.l.b16 %v1616
        %v1649 = vunpack.c.l.b16 %v1617
        %v1650 = vunpack.c.l.b16 %v1618
        %v1651 = vpack.c.b16 %v1636, %v1635
        %v1652 = vpack.c.b16 %v1638, %v1637
        %v1653 = vpack.c.b16 %v1640, %v1639
        %v1654 = vpack.c.b16 %v1642, %v1641
        %v1655 = vpack.c.b16 %v1644, %v1643
        %v1656 = vpack.c.b16 %v1646, %v1645
        %v1657 = vpack.c.b16 %v1648, %v1647
        %v1658 = vpack.c.b16 %v1650, %v1649
        %1667 = vmatpush.bf16.msra.mxu0 %v1658
        %1668 = vmatpush.bf16.msra.mxu0 %v1657
        %1669 = vmatpush.bf16.msra.mxu0 %v1656
        %1670 = vmatpush.bf16.msra.mxu0 %v1655
        %1671 = vmatpush.bf16.msra.mxu0 %v1654
        %1672 = vmatpush.bf16.msra.mxu0 %v1653
        %1673 = vmatpush.bf16.msra.mxu0 %v1652
        %1674 = vmatpush.bf16.msra.mxu0 %v1651
        %1675 = vmatmul.bf16.gmra.mxu0 %v645
        %v1676 = vpop.f32.mrf.mxu0
        %v1677 = vadd.f32 0.0, %v1676
        %v1678 = vpop.f32.mrf.mxu0
        %v1679 = vadd.f32 0.0, %v1678
        %1680 = vmatmul.bf16.gmra.mxu0 %v657
        %v1681 = vpop.f32.mrf.mxu0
        %v1682 = vadd.f32 0.0, %v1681
        %v1683 = vpop.f32.mrf.mxu0
        %v1684 = vadd.f32 0.0, %v1683
        %1685 = vmatmul.bf16.gmra.mxu0 %v669
        %v1686 = vpop.f32.mrf.mxu0
        %v1687 = vadd.f32 0.0, %v1686
        %v1688 = vpop.f32.mrf.mxu0
        %v1689 = vadd.f32 0.0, %v1688
        %1690 = vmatmul.bf16.gmra.mxu0 %v681
        %v1691 = vpop.f32.mrf.mxu0
        %v1692 = vadd.f32 0.0, %v1691
        %v1693 = vpop.f32.mrf.mxu0
        %v1694 = vadd.f32 0.0, %v1693
        %1695 = vmatmul.bf16.gmra.mxu0 %v693
        %v1696 = vpop.f32.mrf.mxu0
        %v1697 = vadd.f32 0.0, %v1696
        %v1698 = vpop.f32.mrf.mxu0
        %v1699 = vadd.f32 0.0, %v1698
        %1700 = vmatmul.bf16.gmra.mxu0 %v705
        %v1701 = vpop.f32.mrf.mxu0
        %v1702 = vadd.f32 0.0, %v1701
        %v1703 = vpop.f32.mrf.mxu0
        %v1704 = vadd.f32 0.0, %v1703
        %1705 = vmatmul.bf16.gmra.mxu0 %v717
        %v1706 = vpop.f32.mrf.mxu0
        %v1707 = vadd.f32 0.0, %v1706
        %v1708 = vpop.f32.mrf.mxu0
        %v1709 = vadd.f32 0.0, %v1708
        %1710 = vmatmul.bf16.gmra.mxu0 %v1600
        %v1711 = vpop.f32.mrf.mxu0
        %v1712 = vadd.f32 0.0, %v1711
        %v1713 = vpop.f32.mrf.mxu0
        %v1714 = vadd.f32 0.0, %v1713
        %1715 = vdwg.mxu0
        %v1732 = vunpack.c.l.b16 %v1573
        %v1733 = vunpack.c.l.b16 %v1574
        %v1734 = vunpack.c.l.b16 %v1575
        %v1735 = vunpack.c.l.b16 %v1576
        %v1736 = vunpack.c.l.b16 %v1577
        %v1737 = vunpack.c.l.b16 %v1578
        %v1738 = vunpack.c.l.b16 %v1579
        %v1739 = vunpack.c.l.b16 %v1580
        %v1740 = vunpack.c.l.b16 %v1581
        %v1741 = vunpack.c.l.b16 %v1582
        %v1742 = vunpack.c.l.b16 %v1583
        %v1743 = vunpack.c.l.b16 %v1584
        %v1744 = vunpack.c.l.b16 %v1585
        %v1745 = vunpack.c.l.b16 %v1586
        %v1746 = vunpack.c.l.b16 %v1587
        %v1747 = vunpack.c.l.b16 %v1588
        %v1748 = vpack.c.b16 %v1733, %v1732
        %v1749 = vpack.c.b16 %v1735, %v1734
        %v1750 = vpack.c.b16 %v1737, %v1736
        %v1751 = vpack.c.b16 %v1739, %v1738
        %v1752 = vpack.c.b16 %v1741, %v1740
        %v1753 = vpack.c.b16 %v1743, %v1742
        %v1754 = vpack.c.b16 %v1745, %v1744
        %v1755 = vpack.c.b16 %v1747, %v1746
        %1764 = vmatpush.bf16.msra.mxu0 %v1755
        %1765 = vmatpush.bf16.msra.mxu0 %v1754
        %1766 = vmatpush.bf16.msra.mxu0 %v1753
        %1767 = vmatpush.bf16.msra.mxu0 %v1752
        %1768 = vmatpush.bf16.msra.mxu0 %v1751
        %1769 = vmatpush.bf16.msra.mxu0 %v1750
        %1770 = vmatpush.bf16.msra.mxu0 %v1749
        %1771 = vmatpush.bf16.msra.mxu0 %v1748
        %1772 = vmatmul.bf16.gmra.mxu0 %v589
        %v1773 = vpop.f32.mrf.mxu0
        %v1774 = vadd.f32 %v1677, %v1773
        %v1775 = vpop.f32.mrf.mxu0
        %v1776 = vadd.f32 %v1679, %v1775
        %1777 = vmatmul.bf16.gmra.mxu0 %v590
        %v1778 = vpop.f32.mrf.mxu0
        %v1779 = vadd.f32 %v1682, %v1778
        %v1780 = vpop.f32.mrf.mxu0
        %v1781 = vadd.f32 %v1684, %v1780
        %1782 = vmatmul.bf16.gmra.mxu0 %v591
        %v1783 = vpop.f32.mrf.mxu0
        %v1784 = vadd.f32 %v1687, %v1783
        %v1785 = vpop.f32.mrf.mxu0
        %v1786 = vadd.f32 %v1689, %v1785
        %1787 = vmatmul.bf16.gmra.mxu0 %v592
        %v1788 = vpop.f32.mrf.mxu0
        %v1789 = vadd.f32 %v1692, %v1788
        %v1790 = vpop.f32.mrf.mxu0
        %v1791 = vadd.f32 %v1694, %v1790
        %1792 = vmatmul.bf16.gmra.mxu0 %v593
        %v1793 = vpop.f32.mrf.mxu0
        %v1794 = vadd.f32 %v1697, %v1793
        %v1795 = vpop.f32.mrf.mxu0
        %v1796 = vadd.f32 %v1699, %v1795
        %1797 = vmatmul.bf16.gmra.mxu0 %v594
        %v1798 = vpop.f32.mrf.mxu0
        %v1799 = vadd.f32 %v1702, %v1798
        %v1800 = vpop.f32.mrf.mxu0
        %v1801 = vadd.f32 %v1704, %v1800
        %1802 = vmatmul.bf16.gmra.mxu0 %v595
        %v1803 = vpop.f32.mrf.mxu0
        %v1804 = vadd.f32 %v1707, %v1803
        %v1805 = vpop.f32.mrf.mxu0
        %v1806 = vadd.f32 %v1709, %v1805
        %1807 = vmatmul.bf16.gmra.mxu0 %v1177
        %v1808 = vpop.f32.mrf.mxu0
        %v1809 = vadd.f32 %v1712, %v1808
        %v1810 = vpop.f32.mrf.mxu0
        %v1811 = vadd.f32 %v1714, %v1810
        %1812 = vdwg.mxu0
        %v1815 = vrot.slane %v1177, 1
        %v1816 = vrot.slane %v1179, 1
        %v1817 = vsel %vm953, %v1815, %v1816
        %s1819 = scalar_lea.vmem [#allocation7], 512
        %v1820 = vld [vmem:[%s1819] sm:$0xf]
        %v1821 = vld [vmem:[%s1819 + $0x4] sm:$0xf]
        %v1822 = vld [vmem:[%s1819 + $0x8] sm:$0xf]
        %v1823 = vld [vmem:[%s1819 + $0xc] sm:$0xf]
        %v1824 = vld [vmem:[%s1819 + $0x10] sm:$0xf]
        %v1825 = vld [vmem:[%s1819 + $0x14] sm:$0xf]
        %v1826 = vld [vmem:[%s1819 + $0x18] sm:$0xf]
        %v1827 = vld [vmem:[%s1819 + $0x1c] sm:$0xf]
        %v1828 = vld [vmem:[%s1819 + $0x20] sm:$0xf]
        %v1829 = vld [vmem:[%s1819 + $0x24] sm:$0xf]
        %v1830 = vld [vmem:[%s1819 + $0x28] sm:$0xf]
        %v1831 = vld [vmem:[%s1819 + $0x2c] sm:$0xf]
        %v1832 = vld [vmem:[%s1819 + $0x30] sm:$0xf]
        %v1833 = vld [vmem:[%s1819 + $0x34] sm:$0xf]
        %v1834 = vld [vmem:[%s1819 + $0x38] sm:$0xf]
        %v1835 = vld [vmem:[%s1819 + $0x3c] sm:$0xf]
        %v1852 = vunpack.c.l.b16 %v1820
        %v1853 = vunpack.c.l.b16 %v1821
        %v1854 = vunpack.c.l.b16 %v1822
        %v1855 = vunpack.c.l.b16 %v1823
        %v1856 = vunpack.c.l.b16 %v1824
        %v1857 = vunpack.c.l.b16 %v1825
        %v1858 = vunpack.c.l.b16 %v1826
        %v1859 = vunpack.c.l.b16 %v1827
        %v1860 = vunpack.c.l.b16 %v1828
        %v1861 = vunpack.c.l.b16 %v1829
        %v1862 = vunpack.c.l.b16 %v1830
        %v1863 = vunpack.c.l.b16 %v1831
        %v1864 = vunpack.c.l.b16 %v1832
        %v1865 = vunpack.c.l.b16 %v1833
        %v1866 = vunpack.c.l.b16 %v1834
        %v1867 = vunpack.c.l.b16 %v1835
        %v1868 = vpack.c.b16 %v1853, %v1852
        %v1869 = vpack.c.b16 %v1855, %v1854
        %v1870 = vpack.c.b16 %v1857, %v1856
        %v1871 = vpack.c.b16 %v1859, %v1858
        %v1872 = vpack.c.b16 %v1861, %v1860
        %v1873 = vpack.c.b16 %v1863, %v1862
        %v1874 = vpack.c.b16 %v1865, %v1864
        %v1875 = vpack.c.b16 %v1867, %v1866
        %1884 = vmatpush.bf16.msra.mxu0 %v1875
        %1885 = vmatpush.bf16.msra.mxu0 %v1874
        %1886 = vmatpush.bf16.msra.mxu0 %v1873
        %1887 = vmatpush.bf16.msra.mxu0 %v1872
        %1888 = vmatpush.bf16.msra.mxu0 %v1871
        %1889 = vmatpush.bf16.msra.mxu0 %v1870
        %1890 = vmatpush.bf16.msra.mxu0 %v1869
        %1891 = vmatpush.bf16.msra.mxu0 %v1868
        %1892 = vmatmul.bf16.gmra.mxu0 %v959
        %v1893 = vpop.f32.mrf.mxu0
        %v1894 = vadd.f32 0.0, %v1893
        %v1895 = vpop.f32.mrf.mxu0
        %v1896 = vadd.f32 0.0, %v1895
        %1897 = vmatmul.bf16.gmra.mxu0 %v962
        %v1898 = vpop.f32.mrf.mxu0
        %v1899 = vadd.f32 0.0, %v1898
        %v1900 = vpop.f32.mrf.mxu0
        %v1901 = vadd.f32 0.0, %v1900
        %1902 = vmatmul.bf16.gmra.mxu0 %v965
        %v1903 = vpop.f32.mrf.mxu0
        %v1904 = vadd.f32 0.0, %v1903
        %v1905 = vpop.f32.mrf.mxu0
        %v1906 = vadd.f32 0.0, %v1905
        %1907 = vmatmul.bf16.gmra.mxu0 %v968
        %v1908 = vpop.f32.mrf.mxu0
        %v1909 = vadd.f32 0.0, %v1908
        %v1910 = vpop.f32.mrf.mxu0
        %v1911 = vadd.f32 0.0, %v1910
        %1912 = vmatmul.bf16.gmra.mxu0 %v971
        %v1913 = vpop.f32.mrf.mxu0
        %v1914 = vadd.f32 0.0, %v1913
        %v1915 = vpop.f32.mrf.mxu0
        %v1916 = vadd.f32 0.0, %v1915
        %1917 = vmatmul.bf16.gmra.mxu0 %v974
        %v1918 = vpop.f32.mrf.mxu0
        %v1919 = vadd.f32 0.0, %v1918
        %v1920 = vpop.f32.mrf.mxu0
        %v1921 = vadd.f32 0.0, %v1920
        %1922 = vmatmul.bf16.gmra.mxu0 %v977
        %v1923 = vpop.f32.mrf.mxu0
        %v1924 = vadd.f32 0.0, %v1923
        %v1925 = vpop.f32.mrf.mxu0
        %v1926 = vadd.f32 0.0, %v1925
        %1927 = vmatmul.bf16.gmra.mxu0 %v1817
        %v1928 = vpop.f32.mrf.mxu0
        %v1929 = vadd.f32 0.0, %v1928
        %v1930 = vpop.f32.mrf.mxu0
        %v1931 = vadd.f32 0.0, %v1930
        %1932 = vdwg.mxu0
        %v1933 = vadd.f32 %v1774, %v1894
        %v1934 = vadd.f32 %v1776, %v1896
        %v1935 = vadd.f32 %v1779, %v1899
        %v1936 = vadd.f32 %v1781, %v1901
        %v1937 = vadd.f32 %v1784, %v1904
        %v1938 = vadd.f32 %v1786, %v1906
        %v1939 = vadd.f32 %v1789, %v1909
        %v1940 = vadd.f32 %v1791, %v1911
        %v1941 = vadd.f32 %v1794, %v1914
        %v1942 = vadd.f32 %v1796, %v1916
        %v1943 = vadd.f32 %v1799, %v1919
        %v1944 = vadd.f32 %v1801, %v1921
        %v1945 = vadd.f32 %v1804, %v1924
        %v1946 = vadd.f32 %v1806, %v1926
        %v1947 = vadd.f32 %v1809, %v1929
        %v1948 = vadd.f32 %v1811, %v1931
        %v1949 = vadd.f32 %v1556, %v1933
        %v1950 = vadd.f32 %v1557, %v1934
        %v1951 = vadd.f32 %v1558, %v1935
        %v1952 = vadd.f32 %v1559, %v1936
        %v1953 = vadd.f32 %v1560, %v1937
        %v1954 = vadd.f32 %v1561, %v1938
        %v1955 = vadd.f32 %v1562, %v1939
        %v1956 = vadd.f32 %v1563, %v1940
        %v1957 = vadd.f32 %v1564, %v1941
        %v1958 = vadd.f32 %v1565, %v1942
        %v1959 = vadd.f32 %v1566, %v1943
        %v1960 = vadd.f32 %v1567, %v1944
        %v1961 = vadd.f32 %v1568, %v1945
        %v1962 = vadd.f32 %v1569, %v1946
        %v1963 = vadd.f32 %v1570, %v1947
        %v1964 = vadd.f32 %v1571, %v1948
        %v1965 = vld [vmem:[%s3] sm:$0x1]
        %v1967 = vperm.slane %v1965, 0
        %v1969 = vadd.f32 %v1949, %v1967
        %v1970 = vadd.f32 %v1950, %v1967
        %v1971 = vadd.f32 %v1951, %v1967
        %v1972 = vadd.f32 %v1952, %v1967
        %v1973 = vadd.f32 %v1953, %v1967
        %v1974 = vadd.f32 %v1954, %v1967
        %v1975 = vadd.f32 %v1955, %v1967
        %v1976 = vadd.f32 %v1956, %v1967
        %v1977 = vadd.f32 %v1957, %v1967
        %v1978 = vadd.f32 %v1958, %v1967
        %v1979 = vadd.f32 %v1959, %v1967
        %v1980 = vadd.f32 %v1960, %v1967
        %v1981 = vadd.f32 %v1961, %v1967
        %v1982 = vadd.f32 %v1962, %v1967
        %v1983 = vadd.f32 %v1963, %v1967
        %v1984 = vadd.f32 %v1964, %v1967
        %v1985 = vpack.c.bf16 %v1969, %v1969
        %v1986 = vpack.c.bf16 %v1970, %v1970
        %v1987 = vpack.c.bf16 %v1971, %v1971
        %v1988 = vpack.c.bf16 %v1972, %v1972
        %v1989 = vpack.c.bf16 %v1973, %v1973
        %v1990 = vpack.c.bf16 %v1974, %v1974
        %v1991 = vpack.c.bf16 %v1975, %v1975
        %v1992 = vpack.c.bf16 %v1976, %v1976
        %v1993 = vpack.c.bf16 %v1977, %v1977
        %v1994 = vpack.c.bf16 %v1978, %v1978
        %v1995 = vpack.c.bf16 %v1979, %v1979
        %v1996 = vpack.c.bf16 %v1980, %v1980
        %v1997 = vpack.c.bf16 %v1981, %v1981
        %v1998 = vpack.c.bf16 %v1982, %v1982
        %v1999 = vpack.c.bf16 %v1983, %v1983
        %v2000 = vpack.c.bf16 %v1984, %v1984
        %2001 = vst [vmem:[%s314] sm:$0xf] %v1985
        %2002 = vst [vmem:[%s314 + $0x4] sm:$0xf] %v1986
        %2003 = vst [vmem:[%s314 + $0x8] sm:$0xf] %v1987
        %2004 = vst [vmem:[%s314 + $0xc] sm:$0xf] %v1988
        %2005 = vst [vmem:[%s314 + $0x10] sm:$0xf] %v1989
        %2006 = vst [vmem:[%s314 + $0x14] sm:$0xf] %v1990
        %2007 = vst [vmem:[%s314 + $0x18] sm:$0xf] %v1991
        %2008 = vst [vmem:[%s314 + $0x1c] sm:$0xf] %v1992
        %2009 = vst [vmem:[%s314 + $0x20] sm:$0xf] %v1993
        %2010 = vst [vmem:[%s314 + $0x24] sm:$0xf] %v1994
        %2011 = vst [vmem:[%s314 + $0x28] sm:$0xf] %v1995
        %2012 = vst [vmem:[%s314 + $0x2c] sm:$0xf] %v1996
        %2013 = vst [vmem:[%s314 + $0x30] sm:$0xf] %v1997
        %2014 = vst [vmem:[%s314 + $0x34] sm:$0xf] %v1998
        %2015 = vst [vmem:[%s314 + $0x38] sm:$0xf] %v1999
        %2016 = vst [vmem:[%s314 + $0x3c] sm:$0xf] %v2000
        %v2017 = vadd.f32 %v1969, %v1970
        %v2018 = vadd.f32 %v2017, %v1971
        %v2019 = vadd.f32 %v2018, %v1972
        %v2020 = vadd.f32 %v2019, %v1973
        %v2021 = vadd.f32 %v2020, %v1974
        %v2022 = vadd.f32 %v2021, %v1975
        %v2023 = vadd.f32 %v2022, %v1976
        %v2024 = vadd.f32 %v2023, %v1977
        %v2025 = vadd.f32 %v2024, %v1978
        %v2026 = vadd.f32 %v2025, %v1979
        %v2027 = vadd.f32 %v2026, %v1980
        %v2028 = vadd.f32 %v2027, %v1981
        %v2029 = vadd.f32 %v2028, %v1982
        %v2030 = vadd.f32 %v2029, %v1983
        %v2031 = vadd.f32 %v2030, %v1984
        %v2032 = vrot.slane %v2031, 4
        %v2033 = vadd.f32 %v2031, %v2032
        %v2034 = vrot.slane %v2033, 2
        %v2035 = vadd.f32 %v2033, %v2034
        %v2036 = vrot.slane %v2035, 1
        %v2037 = vadd.f32 %v2035, %v2036
        %v2038 = vmul.f32 %v1969, %v1969
        %v2039 = vmul.f32 %v1970, %v1970
        %v2040 = vmul.f32 %v1971, %v1971
        %v2041 = vmul.f32 %v1972, %v1972
        %v2042 = vmul.f32 %v1973, %v1973
        %v2043 = vmul.f32 %v1974, %v1974
        %v2044 = vmul.f32 %v1975, %v1975
        %v2045 = vmul.f32 %v1976, %v1976
        %v2046 = vmul.f32 %v1977, %v1977
        %v2047 = vmul.f32 %v1978, %v1978
        %v2048 = vmul.f32 %v1979, %v1979
        %v2049 = vmul.f32 %v1980, %v1980
        %v2050 = vmul.f32 %v1981, %v1981
        %v2051 = vmul.f32 %v1982, %v1982
        %v2052 = vmul.f32 %v1983, %v1983
        %v2053 = vmul.f32 %v1984, %v1984
        %v2054 = vadd.f32 %v2038, %v2039
        %v2055 = vadd.f32 %v2054, %v2040
        %v2056 = vadd.f32 %v2055, %v2041
        %v2057 = vadd.f32 %v2056, %v2042
        %v2058 = vadd.f32 %v2057, %v2043
        %v2059 = vadd.f32 %v2058, %v2044
        %v2060 = vadd.f32 %v2059, %v2045
        %v2061 = vadd.f32 %v2060, %v2046
        %v2062 = vadd.f32 %v2061, %v2047
        %v2063 = vadd.f32 %v2062, %v2048
        %v2064 = vadd.f32 %v2063, %v2049
        %v2065 = vadd.f32 %v2064, %v2050
        %v2066 = vadd.f32 %v2065, %v2051
        %v2067 = vadd.f32 %v2066, %v2052
        %v2068 = vadd.f32 %v2067, %v2053
        %v2069 = vrot.slane %v2068, 4
        %v2070 = vadd.f32 %v2068, %v2069
        %v2071 = vrot.slane %v2070, 2
        %v2072 = vadd.f32 %v2070, %v2071
        %v2073 = vrot.slane %v2072, 1
        %v2074 = vadd.f32 %v2072, %v2073
        %vm2075 = vcmask 1040384
        %v2076 = vsel %vm2075, %v2037, %v2074
        %2077 = vst [vmem:[%s321] sm:$0x3] %v2076
        %s2078 = sand.u32 %s163, 1
        %s2079 = scalar_lea.sflag [#allocation6], %s2078
        %s2080 = sand.u32 %s163, 1
        %s2081 = smul.addr %s2080, 64
        %s2082 = scalar_lea.vmem [#allocation9], %s2081
        %s2083 = sand.u32 %s191, 1
        %s2084 = scalar_lea.sflag [#allocation11], %s2083
        %s2085 = sand.u32 %s191, 1
        %s2086 = smul.addr %s2085, 2
        %s2087 = scalar_lea.vmem [#allocation10], %s2086
        // Predicated region
        $region57: #{tpu_custom_call.1} parent=39 // pred_check
          %p2088 = pneg %p173
        $region58: #{tpu_custom_call.1} parent=39 // pred_check_branch
          %2090 = sbr.rel (%p2088) target = $region60
        $region59: #{tpu_custom_call.1} parent=39 // pred_region
          %s2091 = smul.u32 8, %s34
          %2093 = vsyncadd %s2079, 0
          %s2094 = smul.addr %s2091, 2
          %s2095 = smul.addr %s33, 32
          %s2096 = sadd.s32 %s2094, %s2095
          %s2097 = smul.addr %s2096, 4
          %s2098 = scalar_lea.hbm %s6, %s2097
          %s2099 = sshll.u32 %s2082, 4
          %s2100 = int_to_ptr.vmem [resolvable:$true] %s2099
          %s2101 = sshll.u32 %s2098, 4
          %s2102 = int_to_ptr.hbm [resolvable:$true] %s2101
          %2107 = dma.vmem_to_hbm [thread:$0]  %s2100, 1024, %s2102, %s2079, 64, 64, 4
        $region60: #{tpu_custom_call.1} parent=39 // pred_fallthru
          _
        // Predicated region
        $region61: #{tpu_custom_call.1} parent=39 // pred_check
          %p2108 = pneg %p201
        $region62: #{tpu_custom_call.1} parent=39 // pred_check_branch
          %2110 = sbr.rel (%p2108) target = $region64
        $region63: #{tpu_custom_call.1} parent=39 // pred_region
          %2112 = vsyncadd %s2084, 0
          %s2113 = smul.addr %s33, 2
          %s2114 = sadd.s32 %s34, %s2113
          %s2115 = smul.addr %s2114, 2
          %s2116 = scalar_lea.hbm %s7, %s2115
          %s2118 = sshll.u32 %s2087, 4
          %s2119 = int_to_ptr.vmem [resolvable:$true] %s2118
          %s2120 = sshll.u32 %s2116, 4
          %s2121 = int_to_ptr.hbm [resolvable:$true] %s2120
          %2123 = dma.vmem_to_hbm [thread:$0]  %s2119, 32, %s2121, %s2084
        $region64: #{tpu_custom_call.1} parent=39 // pred_fallthru
          _
      $region40: #{tpu_custom_call.1} parent=5 // pred_fallthru
        _
      %p2124 = scmp.le.s32.totalorder 2, %s24
      // Predicated region
      $region65: #{tpu_custom_call.1} parent=5 // pred_check
        %p2125 = pneg %p2124
      $region66: #{tpu_custom_call.1} parent=5 // pred_check_branch
        %2127 = sbr.rel (%p2125) target = $region68
      $region67: #{tpu_custom_call.1} parent=5 // pred_region
        %s2128 = ssub.s32 %s24, 2
        // Predicated region
        $region69: #{tpu_custom_call.1} parent=67 // pred_check
          %p2129 = pneg %p179
        $region70: #{tpu_custom_call.1} parent=67 // pred_check_branch
          %2131 = sbr.rel (%p2129) target = $region72
        $region71: #{tpu_custom_call.1} parent=67 // pred_region
          %s2132 = sand.u32 %s164, 1
          %s2133 = scalar_lea.sflag [#allocation6], %s2132
          %s2134 = sand.u32 %s164, 1
          %s2135 = smul.addr %s2134, 64
          %s2136 = scalar_lea.vmem [#allocation9], %s2135
          %2138 = dma.done %s2133, 1024
        $region72: #{tpu_custom_call.1} parent=67 // pred_fallthru
          _
        // Predicated region
        $region73: #{tpu_custom_call.1} parent=67 // pred_check
          %p2139 = pneg %p207
        $region74: #{tpu_custom_call.1} parent=67 // pred_check_branch
          %2141 = sbr.rel (%p2139) target = $region76
        $region75: #{tpu_custom_call.1} parent=67 // pred_region
          %s2142 = sand.u32 %s192, 1
          %s2143 = scalar_lea.sflag [#allocation11], %s2142
          %s2144 = sand.u32 %s192, 1
          %s2145 = smul.addr %s2144, 2
          %s2146 = scalar_lea.vmem [#allocation10], %s2145
          %2148 = dma.done %s2143, 32
        $region76: #{tpu_custom_call.1} parent=67 // pred_fallthru
          _
      $region68: #{tpu_custom_call.1} parent=5 // pred_fallthru
        _
    $region6: #{tpu_custom_call.1} parent=1 // loop_footer
      %s28 = sadd.s32 1, %s24
    $region7: #{tpu_custom_call.1} parent=1 // loop_footer_branch
      %23 = sbr.rel target = $region3
    $region8: #{tpu_custom_call.1} parent=1 // loop_exit
      _
    %2149 = vsyncpa [#allocation5], 1
    %s2150 = scalar_lea.sflag [#allocation5], 1
    %2151 = vsyncpa %s2150, 1
    %2152 = vsyncpa [#allocation8], 1
    %2153 = vsyncpa [#allocation6], 1
    %s2154 = scalar_lea.sflag [#allocation6], 1
    %2155 = vsyncpa %s2154, 1
    %2156 = vsyncpa [#allocation11], 1
    %s2157 = scalar_lea.sflag [#allocation11], 1
    %2158 = vsyncpa %s2157, 1
  %2159 = vsyncmov [#allocation3]
  %s2160 = vpop.sfrf %2159
  %p2161 = scmp.eq.s32.totalorder %s2160, 0
  %p2162 = pneg %p2161
  %2164 = shalt.err (%p2162)
  %s2165 = scalar_lea.sflag [#allocation3], 1
  %2166 = vsyncmov %s2165
  %s2167 = vpop.sfrf %2166
  %p2168 = scmp.eq.s32.totalorder %s2167, 0
  %p2169 = pneg %p2168
  %2171 = shalt.err (%p2169)

</llo_original>
